<compile_context>
chip_gen: v7x
topology: tpu7x:2x2x1
jax: 0.10.0
libtpu: 0.0.40
codegen_flags: <defaults>
</compile_context>

<pallas_src>
import functools

import jax
import jax.numpy as jnp
from jax.experimental import pallas as pl
from jax.experimental.pallas import tpu as pltpu


# ----------------------------------------------------------------------------
# Fused Pallas kernel: one grid step == one LSTM (recurrence + partial classifier)
# ----------------------------------------------------------------------------
def _fused_lstm_kernel(x_ref, len_ref, h0_ref, c0_ref, w_ih_ref, w_hh_ref, b_ref,
                       w_out_ref, out_ref, gx_scr):
  """Per grid step (leading stacking dim squeezed):

    x_ref    : (T*Bp, D)  bf16  time-major rows, row index = t*Bp + b
    len_ref  : (Bp, 1)    int32 sequence lengths (0 for padded batch rows)
    h0_ref   : (Bp, H)    f32
    c0_ref   : (Bp, H)    f32
    w_ih_ref : (D, 4H)    bf16  gate order i, f, g, o (PyTorch)
    w_hh_ref : (H, 4H)    bf16
    b_ref    : (1, 4H)    f32   b_ih + b_hh
    w_out_ref: (H, C)     f32   this LSTM's half of hidden_to_stance.weight^T
    out_ref  : (Bp, C)    f32   partial logits (bias added in the wrapper)
    gx_scr   : (T*Bp, 4H) f32   hoisted input projection
  """
  Bp, H = h0_ref.shape
  T = x_ref.shape[0] // Bp

  # Hoisted input projection: one big, well-utilized MXU call, off the serial path.
  gx_scr[...] = (
      jnp.dot(x_ref[...], w_ih_ref[...], preferred_element_type=jnp.float32)
      + b_ref[...])

  # Per-row lengths, broadcast once outside the loop (avoids per-step lane bcast).
  len_bh = jnp.broadcast_to(len_ref[...], (Bp, H))          # (Bp, H) int32

  def step(t, carry):
    h, c = carry                                            # (Bp, H) f32, in vregs
    row = pl.multiple_of(t * Bp, Bp)                        # sublane-aligned slice
    gates = (gx_scr[pl.ds(row, Bp), :]
             + jnp.dot(h.astype(jnp.bfloat16), w_hh_ref[...],
                       preferred_element_type=jnp.float32))  # (Bp, 4H) f32
    # Static 32-lane slices; at H=32 these are cheap XLU extracts of one vreg.
    i_g = jax.nn.sigmoid(gates[:, 0 * H:1 * H])
    f_g = jax.nn.sigmoid(gates[:, 1 * H:2 * H])
    g_g = jnp.tanh(gates[:, 2 * H:3 * H])
    o_g = jax.nn.sigmoid(gates[:, 3 * H:4 * H])
    c_new = f_g * c + i_g * g_g
    h_new = o_g * jnp.tanh(c_new)
    upd = t < len_bh            # freeze h/c once t >= length[b] (packed-seq semantics)
    return jnp.where(upd, h_new, h), jnp.where(upd, c_new, c)

  h_fin, _ = jax.lax.fori_loop(0, T, step, (h0_ref[...], c0_ref[...]),
                               unroll=(T <= 16))

  # This LSTM's contribution to hidden_to_stance: X_half @ W_half^T.
  out_ref[...] = jnp.dot(h_fin, w_out_ref[...],
                         preferred_element_type=jnp.float32)


# ----------------------------------------------------------------------------
# Wrapper: pack both LSTMs onto the grid axis, call the fused kernel once.
# ----------------------------------------------------------------------------
def _round_up(n, m):
  return (n + m - 1) // m * m


def forward(params, headline, article, a_lengths):
  """headline: (B, Th, D), article: (B, Ta, D), a_lengths: (B,) int32 -> (B, C)."""
  B, Th, Dh = headline.shape
  _, Ta, Da = article.shape
  p1, p2, lin = params["lstm1"], params["lstm2"], params["hidden_to_stance"]
  Hh, Ha = p1["w_hh"].shape[1], p2["w_hh"].shape[1]
  # Stacking the two LSTMs onto one grid axis requires matching dims (true here).
  assert Dh == Da and Hh == Ha, "stacked-LSTM kernel assumes equal input/hidden dims"
  D, H = Dh, Hh
  C = lin["w"].shape[0]

  T = max(Th, Ta)
  Bp = _round_up(max(B, 8), 8)            # pad batch to a full sublane group

  def pad_b(x):                           # (B, ...) -> (Bp, ...)
    return jnp.pad(x, ((0, Bp - B),) + ((0, 0),) * (x.ndim - 1))

  # init_hidden: torch.randn equivalents (deterministic); padded rows are zero.
  k1, k2, k3, k4 = jax.random.split(params["hidden_key"], 4)
  h0 = jnp.stack([pad_b(jax.random.normal(k1, (B, H), jnp.float32)),
                  pad_b(jax.random.normal(k3, (B, H), jnp.float32))])   # (2, Bp, H)
  c0 = jnp.stack([pad_b(jax.random.normal(k2, (B, H), jnp.float32)),
                  pad_b(jax.random.normal(k4, (B, H), jnp.float32))])   # (2, Bp, H)

  # Time-major, batch/time padded, flattened to (T*Bp, D) bf16 rows [t*Bp + b].
  def prep(x):
    x = jnp.transpose(x, (1, 0, 2))                                     # (Tx, B, D)
    x = jnp.pad(x, ((0, T - x.shape[0]), (0, Bp - B), (0, 0)))
    return x.reshape(T * Bp, D).astype(jnp.bfloat16)
  xs = jnp.stack([prep(headline), prep(article)])                       # (2, T*Bp, D)

  # lstm1 runs the full headline; lstm2 uses a_lengths (pack_padded_sequence).
  lens = jnp.stack([jnp.full((B,), Th, jnp.int32),
                    a_lengths.astype(jnp.int32)])                       # (2, B)
  lens = jnp.pad(lens, ((0, 0), (0, Bp - B)))[:, :, None]               # (2, Bp, 1)

  # Weights: matmul operands in bf16; bias / classifier weights f32.
  w_ih = jnp.stack([p1["w_ih"].T, p2["w_ih"].T]).astype(jnp.bfloat16)   # (2, D, 4H)
  w_hh = jnp.stack([p1["w_hh"].T, p2["w_hh"].T]).astype(jnp.bfloat16)   # (2, H, 4H)
  bias = jnp.stack([(p1["b_ih"] + p1["b_hh"])[None, :],
                    (p2["b_ih"] + p2["b_hh"])[None, :]]).astype(jnp.float32)  # (2,1,4H)
  w_lin = lin["w"].astype(jnp.float32)                                  # (C, 2H)
  w_out = jnp.stack([w_lin[:, :H].T, w_lin[:, H:].T])                   # (2, H, C)

  grid_spec = pltpu.PrefetchScalarGridSpec(
      num_scalar_prefetch=0,
      grid=(2,),                                    # {lstm1, lstm2}
      in_specs=[
          pl.BlockSpec((None, T * Bp, D), lambda i: (i, 0, 0)),
          pl.BlockSpec((None, Bp, 1), lambda i: (i, 0, 0)),
          pl.BlockSpec((None, Bp, H), lambda i: (i, 0, 0)),
          pl.BlockSpec((None, Bp, H), lambda i: (i, 0, 0)),
          pl.BlockSpec((None, D, 4 * H), lambda i: (i, 0, 0)),
          pl.BlockSpec((None, H, 4 * H), lambda i: (i, 0, 0)),
          pl.BlockSpec((None, 1, 4 * H), lambda i: (i, 0, 0)),
          pl.BlockSpec((None, H, C), lambda i: (i, 0, 0)),
      ],
      out_specs=pl.BlockSpec((None, Bp, C), lambda i: (i, 0, 0)),
      scratch_shapes=[pltpu.VMEM((T * Bp, 4 * H), jnp.float32)],
  )
  partials = pl.pallas_call(
      _fused_lstm_kernel,
      out_shape=jax.ShapeDtypeStruct((2, Bp, C), jnp.float32),
      grid_spec=grid_spec,
      compiler_params=pltpu.CompilerParams(
          dimension_semantics=("parallel",)),       # one LSTM per TC on v7x
  )(xs, lens, h0, c0, w_ih, w_hh, bias, w_out)

  # TODO(synk): use_cosines=True branch (cosine-feature concat) not implemented.
  logits = partials[0] + partials[1] + lin["b"].astype(jnp.float32)[None, :]
  return logits[:B]


# ----------------------------------------------------------------------------
# Model parameters (use_cosines=False, nb_lstm_layers=1)
# ----------------------------------------------------------------------------
def init_params(key, d_headline, d_article, h_units_h, h_units_a, n_classes):
  def uniform(k, shape, bound):
    return jax.random.uniform(k, shape, jnp.float32, -bound, bound)

  ks = jax.random.split(key, 11)
  bh = 1.0 / jnp.sqrt(h_units_h)
  ba = 1.0 / jnp.sqrt(h_units_a)
  lin_in = h_units_h + h_units_a
  bl = 1.0 / jnp.sqrt(lin_in)
  return {
      "lstm1": {
          "w_ih": uniform(ks[0], (4 * h_units_h, d_headline), bh),
          "w_hh": uniform(ks[1], (4 * h_units_h, h_units_h), bh),
          "b_ih": uniform(ks[2], (4 * h_units_h,), bh),
          "b_hh": uniform(ks[3], (4 * h_units_h,), bh),
      },
      "lstm2": {
          "w_ih": uniform(ks[4], (4 * h_units_a, d_article), ba),
          "w_hh": uniform(ks[5], (4 * h_units_a, h_units_a), ba),
          "b_ih": uniform(ks[6], (4 * h_units_a,), ba),
          "b_hh": uniform(ks[7], (4 * h_units_a,), ba),
      },
      "hidden_to_stance": {
          "w": uniform(ks[8], (n_classes, lin_in), bl),
          "b": uniform(ks[9], (n_classes,), bl),
      },
      "hidden_key": ks[10],   # used for the torch.randn-style init_hidden
  }


# ----------------------------------------------------------------------------
if __name__ == "__main__":
  # Small shapes consistent with the module's forward.
  B = 2            # BATCH_SIZE
  D = 16           # BERT_DIM (reduced)
  Th = 8           # headline seq len
  Ta = 8           # article max seq len
  Hh = 32          # LSTM.HIDDEN_STATE_h
  Ha = 32          # LSTM.HIDDEN_STATE_a
  C = 4            # LSTM.classes

  key = jax.random.PRNGKey(0)
  k_param, k_head, k_art = jax.random.split(key, 3)

  params = init_params(k_param, D, D, Hh, Ha, C)
  headline = jax.random.normal(k_head, (B, Th, D), jnp.float32)
  article = jax.random.normal(k_art, (B, Ta, D), jnp.float32)
  a_lengths = jnp.array([Ta, 5], dtype=jnp.int32)   # variable lengths (packed seq)

  out = jax.jit(functools.partial(forward, params))(headline, article, a_lengths)
  out = jax.block_until_ready(out)
  assert out.shape == (B, C) and out.dtype == jnp.float32
  print("KERNEL_OK")
</pallas_src>

<mosaic_0001>
module attributes {stable_mosaic.version = 11 : i64} {
  func.func @_fused_lstm_kernel(%arg0: i32, %arg1: memref<1x64x16xbf16, #tpu.memory_space<vmem>>, %arg2: memref<1x8x1xi32, #tpu.memory_space<vmem>>, %arg3: memref<1x8x32xf32, #tpu.memory_space<vmem>>, %arg4: memref<1x8x32xf32, #tpu.memory_space<vmem>>, %arg5: memref<1x16x128xbf16, #tpu.memory_space<vmem>>, %arg6: memref<1x32x128xbf16, #tpu.memory_space<vmem>>, %arg7: memref<1x1x128xf32, #tpu.memory_space<vmem>>, %arg8: memref<1x32x4xf32, #tpu.memory_space<vmem>>, %arg9: memref<1x8x4xf32, #tpu.memory_space<vmem>>, %arg10: memref<64x128xf32, #tpu.memory_space<vmem>>) attributes {dimension_semantics = [#tpu.dimension_semantics<parallel>], iteration_bounds = array<i64: 2>, scalar_prefetch = 0 : i64, scratch_operands = 1 : i64, tpu.core_type = #tpu.core_type<tc>, window_params = [{transform_indices = @transform_0, window_bounds = array<i64: 1, 64, 16>}, {transform_indices = @transform_1, window_bounds = array<i64: 1, 8, 1>}, {transform_indices = @transform_2, window_bounds = array<i64: 1, 8, 32>}, {transform_indices = @transform_3, window_bounds = array<i64: 1, 8, 32>}, {transform_indices = @transform_4, window_bounds = array<i64: 1, 16, 128>}, {transform_indices = @transform_5, window_bounds = array<i64: 1, 32, 128>}, {transform_indices = @transform_6, window_bounds = array<i64: 1, 1, 128>}, {transform_indices = @transform_7, window_bounds = array<i64: 1, 32, 4>}, {transform_indices = @transform_8, window_bounds = array<i64: 1, 8, 4>}]} {
    %c0 = arith.constant 0 : index
    %c0_0 = arith.constant 0 : index
    %c0_1 = arith.constant 0 : index
    %0 = vector.load %arg1[%c0, %c0_0, %c0_1] : memref<1x64x16xbf16, #tpu.memory_space<vmem>>, vector<1x64x16xbf16>
    %1 = vector.shape_cast %0 : vector<1x64x16xbf16> to vector<64x16xbf16>
    %c0_2 = arith.constant 0 : index
    %c0_3 = arith.constant 0 : index
    %c0_4 = arith.constant 0 : index
    %2 = vector.load %arg5[%c0_2, %c0_3, %c0_4] : memref<1x16x128xbf16, #tpu.memory_space<vmem>>, vector<1x16x128xbf16>
    %3 = vector.shape_cast %2 : vector<1x16x128xbf16> to vector<16x128xbf16>
    %cst = arith.constant dense<0.000000e+00> : vector<64x128xf32>
    %4 = tpu.matmul %1, %3, %cst {dimension_numbers = #tpu.dot_dimension_numbers<[1], [0], [0], [1], [0, 0, 1, 1], [], []>} : vector<64x16xbf16>, vector<16x128xbf16>, vector<64x128xf32> -> vector<64x128xf32>
    %c0_5 = arith.constant 0 : index
    %c0_6 = arith.constant 0 : index
    %c0_7 = arith.constant 0 : index
    %5 = vector.load %arg7[%c0_5, %c0_6, %c0_7] : memref<1x1x128xf32, #tpu.memory_space<vmem>>, vector<1x1x128xf32>
    %6 = vector.shape_cast %5 : vector<1x1x128xf32> to vector<1x128xf32>
    %7 = vector.broadcast %6 : vector<1x128xf32> to vector<64x128xf32>
    %8 = arith.addf %4, %7 : vector<64x128xf32>
    %c0_8 = arith.constant 0 : index
    %c0_9 = arith.constant 0 : index
    %9 = vector.load %arg10[%c0_8, %c0_9] : memref<64x128xf32, #tpu.memory_space<vmem>>, vector<64x128xf32>
    tpu.vector_store %arg10[%c0_8, %c0_9], %8 {strides = array<i32>} : memref<64x128xf32, #tpu.memory_space<vmem>>, vector<64x128xf32>,
    %c0_10 = arith.constant 0 : index
    %c0_11 = arith.constant 0 : index
    %c0_12 = arith.constant 0 : index
    %10 = vector.load %arg2[%c0_10, %c0_11, %c0_12] : memref<1x8x1xi32, #tpu.memory_space<vmem>>, vector<1x8x1xi32>
    %11 = vector.shape_cast %10 : vector<1x8x1xi32> to vector<8x1xi32>
    %12 = vector.shape_cast %11 : vector<8x1xi32> to vector<8x1xi32>
    %13 = vector.broadcast %12 : vector<8x1xi32> to vector<8x32xi32>
    %c0_13 = arith.constant 0 : index
    %c0_14 = arith.constant 0 : index
    %c0_15 = arith.constant 0 : index
    %14 = vector.load %arg3[%c0_13, %c0_14, %c0_15] : memref<1x8x32xf32, #tpu.memory_space<vmem>>, vector<1x8x32xf32>
    %15 = vector.shape_cast %14 : vector<1x8x32xf32> to vector<8x32xf32>
    %c0_16 = arith.constant 0 : index
    %c0_17 = arith.constant 0 : index
    %c0_18 = arith.constant 0 : index
    %16 = vector.load %arg4[%c0_16, %c0_17, %c0_18] : memref<1x8x32xf32, #tpu.memory_space<vmem>>, vector<1x8x32xf32>
    %17 = vector.shape_cast %16 : vector<1x8x32xf32> to vector<8x32xf32>
    %c0_i32 = arith.constant 0 : i32
    %c8_i32 = arith.constant 8 : i32
    %18 = arith.muli %c0_i32, %c8_i32 : i32
    %19 = tpu.assume_multiple %18, 8 : i32
    %20 = arith.index_cast %19 : i32 to index
    %c0_19 = arith.constant 0 : index
    %21 = vector.load %arg10[%20, %c0_19] : memref<64x128xf32, #tpu.memory_space<vmem>>, vector<8x128xf32>
    %22 = arith.truncf %15 : vector<8x32xf32> to vector<8x32xbf16>
    %c0_20 = arith.constant 0 : index
    %c0_21 = arith.constant 0 : index
    %c0_22 = arith.constant 0 : index
    %23 = vector.load %arg6[%c0_20, %c0_21, %c0_22] : memref<1x32x128xbf16, #tpu.memory_space<vmem>>, vector<1x32x128xbf16>
    %24 = vector.shape_cast %23 : vector<1x32x128xbf16> to vector<32x128xbf16>
    %cst_23 = arith.constant dense<0.000000e+00> : vector<8x128xf32>
    %25 = tpu.matmul %22, %24, %cst_23 {dimension_numbers = #tpu.dot_dimension_numbers<[1], [0], [0], [1], [0, 0, 1, 1], [], []>} : vector<8x32xbf16>, vector<32x128xbf16>, vector<8x128xf32> -> vector<8x128xf32>
    %26 = arith.addf %21, %25 : vector<8x128xf32>
    %27 = vector.extract_strided_slice %26 {offsets = [0, 0], sizes = [8, 32], strides = [1, 1]} : vector<8x128xf32> to vector<8x32xf32>
    %28 = arith.negf %27 : vector<8x32xf32>
    %29 = math.exp %28 : vector<8x32xf32>
    %cst_24 = arith.constant 1.000000e+00 : f32
    %30 = vector.broadcast %cst_24 : f32 to vector<8x32xf32>
    %31 = arith.addf %30, %29 : vector<8x32xf32>
    %32 = arith.divf %30, %31 : vector<8x32xf32>
    %33 = vector.extract_strided_slice %26 {offsets = [0, 32], sizes = [8, 32], strides = [1, 1]} : vector<8x128xf32> to vector<8x32xf32>
    %34 = arith.negf %33 : vector<8x32xf32>
    %35 = math.exp %34 : vector<8x32xf32>
    %cst_25 = arith.constant 1.000000e+00 : f32
    %36 = vector.broadcast %cst_25 : f32 to vector<8x32xf32>
    %37 = arith.addf %36, %35 : vector<8x32xf32>
    %38 = arith.divf %36, %37 : vector<8x32xf32>
    %39 = vector.extract_strided_slice %26 {offsets = [0, 64], sizes = [8, 32], strides = [1, 1]} : vector<8x128xf32> to vector<8x32xf32>
    %40 = math.tanh %39 : vector<8x32xf32>
    %41 = vector.extract_strided_slice %26 {offsets = [0, 96], sizes = [8, 32], strides = [1, 1]} : vector<8x128xf32> to vector<8x32xf32>
    %42 = arith.negf %41 : vector<8x32xf32>
    %43 = math.exp %42 : vector<8x32xf32>
    %cst_26 = arith.constant 1.000000e+00 : f32
    %44 = vector.broadcast %cst_26 : f32 to vector<8x32xf32>
    %45 = arith.addf %44, %43 : vector<8x32xf32>
    %46 = arith.divf %44, %45 : vector<8x32xf32>
    %47 = arith.mulf %38, %17 : vector<8x32xf32>
    %48 = arith.mulf %32, %40 : vector<8x32xf32>
    %49 = arith.addf %47, %48 : vector<8x32xf32>
    %50 = math.tanh %49 : vector<8x32xf32>
    %51 = arith.mulf %46, %50 : vector<8x32xf32>
    %52 = vector.broadcast %c0_i32 : i32 to vector<8x32xi32>
    %53 = arith.cmpi slt, %52, %13 : vector<8x32xi32>
    %54 = arith.select %53, %51, %15 : vector<8x32xi1>, vector<8x32xf32>
    %55 = arith.select %53, %49, %17 : vector<8x32xi1>, vector<8x32xf32>
    %c1_i32 = arith.constant 1 : i32
    %c8_i32_27 = arith.constant 8 : i32
    %56 = arith.muli %c1_i32, %c8_i32_27 : i32
    %57 = tpu.assume_multiple %56, 8 : i32
    %58 = arith.index_cast %57 : i32 to index
    %c0_28 = arith.constant 0 : index
    %59 = vector.load %arg10[%58, %c0_28] : memref<64x128xf32, #tpu.memory_space<vmem>>, vector<8x128xf32>
    %60 = arith.truncf %54 : vector<8x32xf32> to vector<8x32xbf16>
    %c0_29 = arith.constant 0 : index
    %c0_30 = arith.constant 0 : index
    %c0_31 = arith.constant 0 : index
    %61 = vector.load %arg6[%c0_29, %c0_30, %c0_31] : memref<1x32x128xbf16, #tpu.memory_space<vmem>>, vector<1x32x128xbf16>
    %62 = vector.shape_cast %61 : vector<1x32x128xbf16> to vector<32x128xbf16>
    %cst_32 = arith.constant dense<0.000000e+00> : vector<8x128xf32>
    %63 = tpu.matmul %60, %62, %cst_32 {dimension_numbers = #tpu.dot_dimension_numbers<[1], [0], [0], [1], [0, 0, 1, 1], [], []>} : vector<8x32xbf16>, vector<32x128xbf16>, vector<8x128xf32> -> vector<8x128xf32>
    %64 = arith.addf %59, %63 : vector<8x128xf32>
    %65 = vector.extract_strided_slice %64 {offsets = [0, 0], sizes = [8, 32], strides = [1, 1]} : vector<8x128xf32> to vector<8x32xf32>
    %66 = arith.negf %65 : vector<8x32xf32>
    %67 = math.exp %66 : vector<8x32xf32>
    %cst_33 = arith.constant 1.000000e+00 : f32
    %68 = vector.broadcast %cst_33 : f32 to vector<8x32xf32>
    %69 = arith.addf %68, %67 : vector<8x32xf32>
    %70 = arith.divf %68, %69 : vector<8x32xf32>
    %71 = vector.extract_strided_slice %64 {offsets = [0, 32], sizes = [8, 32], strides = [1, 1]} : vector<8x128xf32> to vector<8x32xf32>
    %72 = arith.negf %71 : vector<8x32xf32>
    %73 = math.exp %72 : vector<8x32xf32>
    %cst_34 = arith.constant 1.000000e+00 : f32
    %74 = vector.broadcast %cst_34 : f32 to vector<8x32xf32>
    %75 = arith.addf %74, %73 : vector<8x32xf32>
    %76 = arith.divf %74, %75 : vector<8x32xf32>
    %77 = vector.extract_strided_slice %64 {offsets = [0, 64], sizes = [8, 32], strides = [1, 1]} : vector<8x128xf32> to vector<8x32xf32>
    %78 = math.tanh %77 : vector<8x32xf32>
    %79 = vector.extract_strided_slice %64 {offsets = [0, 96], sizes = [8, 32], strides = [1, 1]} : vector<8x128xf32> to vector<8x32xf32>
    %80 = arith.negf %79 : vector<8x32xf32>
    %81 = math.exp %80 : vector<8x32xf32>
    %cst_35 = arith.constant 1.000000e+00 : f32
    %82 = vector.broadcast %cst_35 : f32 to vector<8x32xf32>
    %83 = arith.addf %82, %81 : vector<8x32xf32>
    %84 = arith.divf %82, %83 : vector<8x32xf32>
    %85 = arith.mulf %76, %55 : vector<8x32xf32>
    %86 = arith.mulf %70, %78 : vector<8x32xf32>
    %87 = arith.addf %85, %86 : vector<8x32xf32>
    %88 = math.tanh %87 : vector<8x32xf32>
    %89 = arith.mulf %84, %88 : vector<8x32xf32>
    %90 = vector.broadcast %c1_i32 : i32 to vector<8x32xi32>
    %91 = arith.cmpi slt, %90, %13 : vector<8x32xi32>
    %92 = arith.select %91, %89, %54 : vector<8x32xi1>, vector<8x32xf32>
    %93 = arith.select %91, %87, %55 : vector<8x32xi1>, vector<8x32xf32>
    %c2_i32 = arith.constant 2 : i32
    %c8_i32_36 = arith.constant 8 : i32
    %94 = arith.muli %c2_i32, %c8_i32_36 : i32
    %95 = tpu.assume_multiple %94, 8 : i32
    %96 = arith.index_cast %95 : i32 to index
    %c0_37 = arith.constant 0 : index
    %97 = vector.load %arg10[%96, %c0_37] : memref<64x128xf32, #tpu.memory_space<vmem>>, vector<8x128xf32>
    %98 = arith.truncf %92 : vector<8x32xf32> to vector<8x32xbf16>
    %c0_38 = arith.constant 0 : index
    %c0_39 = arith.constant 0 : index
    %c0_40 = arith.constant 0 : index
    %99 = vector.load %arg6[%c0_38, %c0_39, %c0_40] : memref<1x32x128xbf16, #tpu.memory_space<vmem>>, vector<1x32x128xbf16>
    %100 = vector.shape_cast %99 : vector<1x32x128xbf16> to vector<32x128xbf16>
    %cst_41 = arith.constant dense<0.000000e+00> : vector<8x128xf32>
    %101 = tpu.matmul %98, %100, %cst_41 {dimension_numbers = #tpu.dot_dimension_numbers<[1], [0], [0], [1], [0, 0, 1, 1], [], []>} : vector<8x32xbf16>, vector<32x128xbf16>, vector<8x128xf32> -> vector<8x128xf32>
    %102 = arith.addf %97, %101 : vector<8x128xf32>
    %103 = vector.extract_strided_slice %102 {offsets = [0, 0], sizes = [8, 32], strides = [1, 1]} : vector<8x128xf32> to vector<8x32xf32>
    %104 = arith.negf %103 : vector<8x32xf32>
    %105 = math.exp %104 : vector<8x32xf32>
    %cst_42 = arith.constant 1.000000e+00 : f32
    %106 = vector.broadcast %cst_42 : f32 to vector<8x32xf32>
    %107 = arith.addf %106, %105 : vector<8x32xf32>
    %108 = arith.divf %106, %107 : vector<8x32xf32>
    %109 = vector.extract_strided_slice %102 {offsets = [0, 32], sizes = [8, 32], strides = [1, 1]} : vector<8x128xf32> to vector<8x32xf32>
    %110 = arith.negf %109 : vector<8x32xf32>
    %111 = math.exp %110 : vector<8x32xf32>
    %cst_43 = arith.constant 1.000000e+00 : f32
    %112 = vector.broadcast %cst_43 : f32 to vector<8x32xf32>
    %113 = arith.addf %112, %111 : vector<8x32xf32>
    %114 = arith.divf %112, %113 : vector<8x32xf32>
    %115 = vector.extract_strided_slice %102 {offsets = [0, 64], sizes = [8, 32], strides = [1, 1]} : vector<8x128xf32> to vector<8x32xf32>
    %116 = math.tanh %115 : vector<8x32xf32>
    %117 = vector.extract_strided_slice %102 {offsets = [0, 96], sizes = [8, 32], strides = [1, 1]} : vector<8x128xf32> to vector<8x32xf32>
    %118 = arith.negf %117 : vector<8x32xf32>
    %119 = math.exp %118 : vector<8x32xf32>
    %cst_44 = arith.constant 1.000000e+00 : f32
    %120 = vector.broadcast %cst_44 : f32 to vector<8x32xf32>
    %121 = arith.addf %120, %119 : vector<8x32xf32>
    %122 = arith.divf %120, %121 : vector<8x32xf32>
    %123 = arith.mulf %114, %93 : vector<8x32xf32>
    %124 = arith.mulf %108, %116 : vector<8x32xf32>
    %125 = arith.addf %123, %124 : vector<8x32xf32>
    %126 = math.tanh %125 : vector<8x32xf32>
    %127 = arith.mulf %122, %126 : vector<8x32xf32>
    %128 = vector.broadcast %c2_i32 : i32 to vector<8x32xi32>
    %129 = arith.cmpi slt, %128, %13 : vector<8x32xi32>
    %130 = arith.select %129, %127, %92 : vector<8x32xi1>, vector<8x32xf32>
    %131 = arith.select %129, %125, %93 : vector<8x32xi1>, vector<8x32xf32>
    %c3_i32 = arith.constant 3 : i32
    %c8_i32_45 = arith.constant 8 : i32
    %132 = arith.muli %c3_i32, %c8_i32_45 : i32
    %133 = tpu.assume_multiple %132, 8 : i32
    %134 = arith.index_cast %133 : i32 to index
    %c0_46 = arith.constant 0 : index
    %135 = vector.load %arg10[%134, %c0_46] : memref<64x128xf32, #tpu.memory_space<vmem>>, vector<8x128xf32>
    %136 = arith.truncf %130 : vector<8x32xf32> to vector<8x32xbf16>
    %c0_47 = arith.constant 0 : index
    %c0_48 = arith.constant 0 : index
    %c0_49 = arith.constant 0 : index
    %137 = vector.load %arg6[%c0_47, %c0_48, %c0_49] : memref<1x32x128xbf16, #tpu.memory_space<vmem>>, vector<1x32x128xbf16>
    %138 = vector.shape_cast %137 : vector<1x32x128xbf16> to vector<32x128xbf16>
    %cst_50 = arith.constant dense<0.000000e+00> : vector<8x128xf32>
    %139 = tpu.matmul %136, %138, %cst_50 {dimension_numbers = #tpu.dot_dimension_numbers<[1], [0], [0], [1], [0, 0, 1, 1], [], []>} : vector<8x32xbf16>, vector<32x128xbf16>, vector<8x128xf32> -> vector<8x128xf32>
    %140 = arith.addf %135, %139 : vector<8x128xf32>
    %141 = vector.extract_strided_slice %140 {offsets = [0, 0], sizes = [8, 32], strides = [1, 1]} : vector<8x128xf32> to vector<8x32xf32>
    %142 = arith.negf %141 : vector<8x32xf32>
    %143 = math.exp %142 : vector<8x32xf32>
    %cst_51 = arith.constant 1.000000e+00 : f32
    %144 = vector.broadcast %cst_51 : f32 to vector<8x32xf32>
    %145 = arith.addf %144, %143 : vector<8x32xf32>
    %146 = arith.divf %144, %145 : vector<8x32xf32>
    %147 = vector.extract_strided_slice %140 {offsets = [0, 32], sizes = [8, 32], strides = [1, 1]} : vector<8x128xf32> to vector<8x32xf32>
    %148 = arith.negf %147 : vector<8x32xf32>
    %149 = math.exp %148 : vector<8x32xf32>
    %cst_52 = arith.constant 1.000000e+00 : f32
    %150 = vector.broadcast %cst_52 : f32 to vector<8x32xf32>
    %151 = arith.addf %150, %149 : vector<8x32xf32>
    %152 = arith.divf %150, %151 : vector<8x32xf32>
    %153 = vector.extract_strided_slice %140 {offsets = [0, 64], sizes = [8, 32], strides = [1, 1]} : vector<8x128xf32> to vector<8x32xf32>
    %154 = math.tanh %153 : vector<8x32xf32>
    %155 = vector.extract_strided_slice %140 {offsets = [0, 96], sizes = [8, 32], strides = [1, 1]} : vector<8x128xf32> to vector<8x32xf32>
    %156 = arith.negf %155 : vector<8x32xf32>
    %157 = math.exp %156 : vector<8x32xf32>
    %cst_53 = arith.constant 1.000000e+00 : f32
    %158 = vector.broadcast %cst_53 : f32 to vector<8x32xf32>
    %159 = arith.addf %158, %157 : vector<8x32xf32>
    %160 = arith.divf %158, %159 : vector<8x32xf32>
    %161 = arith.mulf %152, %131 : vector<8x32xf32>
    %162 = arith.mulf %146, %154 : vector<8x32xf32>
    %163 = arith.addf %161, %162 : vector<8x32xf32>
    %164 = math.tanh %163 : vector<8x32xf32>
    %165 = arith.mulf %160, %164 : vector<8x32xf32>
    %166 = vector.broadcast %c3_i32 : i32 to vector<8x32xi32>
    %167 = arith.cmpi slt, %166, %13 : vector<8x32xi32>
    %168 = arith.select %167, %165, %130 : vector<8x32xi1>, vector<8x32xf32>
    %169 = arith.select %167, %163, %131 : vector<8x32xi1>, vector<8x32xf32>
    %c4_i32 = arith.constant 4 : i32
    %c8_i32_54 = arith.constant 8 : i32
    %170 = arith.muli %c4_i32, %c8_i32_54 : i32
    %171 = tpu.assume_multiple %170, 8 : i32
    %172 = arith.index_cast %171 : i32 to index
    %c0_55 = arith.constant 0 : index
    %173 = vector.load %arg10[%172, %c0_55] : memref<64x128xf32, #tpu.memory_space<vmem>>, vector<8x128xf32>
    %174 = arith.truncf %168 : vector<8x32xf32> to vector<8x32xbf16>
    %c0_56 = arith.constant 0 : index
    %c0_57 = arith.constant 0 : index
    %c0_58 = arith.constant 0 : index
    %175 = vector.load %arg6[%c0_56, %c0_57, %c0_58] : memref<1x32x128xbf16, #tpu.memory_space<vmem>>, vector<1x32x128xbf16>
    %176 = vector.shape_cast %175 : vector<1x32x128xbf16> to vector<32x128xbf16>
    %cst_59 = arith.constant dense<0.000000e+00> : vector<8x128xf32>
    %177 = tpu.matmul %174, %176, %cst_59 {dimension_numbers = #tpu.dot_dimension_numbers<[1], [0], [0], [1], [0, 0, 1, 1], [], []>} : vector<8x32xbf16>, vector<32x128xbf16>, vector<8x128xf32> -> vector<8x128xf32>
    %178 = arith.addf %173, %177 : vector<8x128xf32>
    %179 = vector.extract_strided_slice %178 {offsets = [0, 0], sizes = [8, 32], strides = [1, 1]} : vector<8x128xf32> to vector<8x32xf32>
    %180 = arith.negf %179 : vector<8x32xf32>
    %181 = math.exp %180 : vector<8x32xf32>
    %cst_60 = arith.constant 1.000000e+00 : f32
    %182 = vector.broadcast %cst_60 : f32 to vector<8x32xf32>
    %183 = arith.addf %182, %181 : vector<8x32xf32>
    %184 = arith.divf %182, %183 : vector<8x32xf32>
    %185 = vector.extract_strided_slice %178 {offsets = [0, 32], sizes = [8, 32], strides = [1, 1]} : vector<8x128xf32> to vector<8x32xf32>
    %186 = arith.negf %185 : vector<8x32xf32>
    %187 = math.exp %186 : vector<8x32xf32>
    %cst_61 = arith.constant 1.000000e+00 : f32
    %188 = vector.broadcast %cst_61 : f32 to vector<8x32xf32>
    %189 = arith.addf %188, %187 : vector<8x32xf32>
    %190 = arith.divf %188, %189 : vector<8x32xf32>
    %191 = vector.extract_strided_slice %178 {offsets = [0, 64], sizes = [8, 32], strides = [1, 1]} : vector<8x128xf32> to vector<8x32xf32>
    %192 = math.tanh %191 : vector<8x32xf32>
    %193 = vector.extract_strided_slice %178 {offsets = [0, 96], sizes = [8, 32], strides = [1, 1]} : vector<8x128xf32> to vector<8x32xf32>
    %194 = arith.negf %193 : vector<8x32xf32>
    %195 = math.exp %194 : vector<8x32xf32>
    %cst_62 = arith.constant 1.000000e+00 : f32
    %196 = vector.broadcast %cst_62 : f32 to vector<8x32xf32>
    %197 = arith.addf %196, %195 : vector<8x32xf32>
    %198 = arith.divf %196, %197 : vector<8x32xf32>
    %199 = arith.mulf %190, %169 : vector<8x32xf32>
    %200 = arith.mulf %184, %192 : vector<8x32xf32>
    %201 = arith.addf %199, %200 : vector<8x32xf32>
    %202 = math.tanh %201 : vector<8x32xf32>
    %203 = arith.mulf %198, %202 : vector<8x32xf32>
    %204 = vector.broadcast %c4_i32 : i32 to vector<8x32xi32>
    %205 = arith.cmpi slt, %204, %13 : vector<8x32xi32>
    %206 = arith.select %205, %203, %168 : vector<8x32xi1>, vector<8x32xf32>
    %207 = arith.select %205, %201, %169 : vector<8x32xi1>, vector<8x32xf32>
    %c5_i32 = arith.constant 5 : i32
    %c8_i32_63 = arith.constant 8 : i32
    %208 = arith.muli %c5_i32, %c8_i32_63 : i32
    %209 = tpu.assume_multiple %208, 8 : i32
    %210 = arith.index_cast %209 : i32 to index
    %c0_64 = arith.constant 0 : index
    %211 = vector.load %arg10[%210, %c0_64] : memref<64x128xf32, #tpu.memory_space<vmem>>, vector<8x128xf32>
    %212 = arith.truncf %206 : vector<8x32xf32> to vector<8x32xbf16>
    %c0_65 = arith.constant 0 : index
    %c0_66 = arith.constant 0 : index
    %c0_67 = arith.constant 0 : index
    %213 = vector.load %arg6[%c0_65, %c0_66, %c0_67] : memref<1x32x128xbf16, #tpu.memory_space<vmem>>, vector<1x32x128xbf16>
    %214 = vector.shape_cast %213 : vector<1x32x128xbf16> to vector<32x128xbf16>
    %cst_68 = arith.constant dense<0.000000e+00> : vector<8x128xf32>
    %215 = tpu.matmul %212, %214, %cst_68 {dimension_numbers = #tpu.dot_dimension_numbers<[1], [0], [0], [1], [0, 0, 1, 1], [], []>} : vector<8x32xbf16>, vector<32x128xbf16>, vector<8x128xf32> -> vector<8x128xf32>
    %216 = arith.addf %211, %215 : vector<8x128xf32>
    %217 = vector.extract_strided_slice %216 {offsets = [0, 0], sizes = [8, 32], strides = [1, 1]} : vector<8x128xf32> to vector<8x32xf32>
    %218 = arith.negf %217 : vector<8x32xf32>
    %219 = math.exp %218 : vector<8x32xf32>
    %cst_69 = arith.constant 1.000000e+00 : f32
    %220 = vector.broadcast %cst_69 : f32 to vector<8x32xf32>
    %221 = arith.addf %220, %219 : vector<8x32xf32>
    %222 = arith.divf %220, %221 : vector<8x32xf32>
    %223 = vector.extract_strided_slice %216 {offsets = [0, 32], sizes = [8, 32], strides = [1, 1]} : vector<8x128xf32> to vector<8x32xf32>
    %224 = arith.negf %223 : vector<8x32xf32>
    %225 = math.exp %224 : vector<8x32xf32>
    %cst_70 = arith.constant 1.000000e+00 : f32
    %226 = vector.broadcast %cst_70 : f32 to vector<8x32xf32>
    %227 = arith.addf %226, %225 : vector<8x32xf32>
    %228 = arith.divf %226, %227 : vector<8x32xf32>
    %229 = vector.extract_strided_slice %216 {offsets = [0, 64], sizes = [8, 32], strides = [1, 1]} : vector<8x128xf32> to vector<8x32xf32>
    %230 = math.tanh %229 : vector<8x32xf32>
    %231 = vector.extract_strided_slice %216 {offsets = [0, 96], sizes = [8, 32], strides = [1, 1]} : vector<8x128xf32> to vector<8x32xf32>
    %232 = arith.negf %231 : vector<8x32xf32>
    %233 = math.exp %232 : vector<8x32xf32>
    %cst_71 = arith.constant 1.000000e+00 : f32
    %234 = vector.broadcast %cst_71 : f32 to vector<8x32xf32>
    %235 = arith.addf %234, %233 : vector<8x32xf32>
    %236 = arith.divf %234, %235 : vector<8x32xf32>
    %237 = arith.mulf %228, %207 : vector<8x32xf32>
    %238 = arith.mulf %222, %230 : vector<8x32xf32>
    %239 = arith.addf %237, %238 : vector<8x32xf32>
    %240 = math.tanh %239 : vector<8x32xf32>
    %241 = arith.mulf %236, %240 : vector<8x32xf32>
    %242 = vector.broadcast %c5_i32 : i32 to vector<8x32xi32>
    %243 = arith.cmpi slt, %242, %13 : vector<8x32xi32>
    %244 = arith.select %243, %241, %206 : vector<8x32xi1>, vector<8x32xf32>
    %245 = arith.select %243, %239, %207 : vector<8x32xi1>, vector<8x32xf32>
    %c6_i32 = arith.constant 6 : i32
    %c8_i32_72 = arith.constant 8 : i32
    %246 = arith.muli %c6_i32, %c8_i32_72 : i32
    %247 = tpu.assume_multiple %246, 8 : i32
    %248 = arith.index_cast %247 : i32 to index
    %c0_73 = arith.constant 0 : index
    %249 = vector.load %arg10[%248, %c0_73] : memref<64x128xf32, #tpu.memory_space<vmem>>, vector<8x128xf32>
    %250 = arith.truncf %244 : vector<8x32xf32> to vector<8x32xbf16>
    %c0_74 = arith.constant 0 : index
    %c0_75 = arith.constant 0 : index
    %c0_76 = arith.constant 0 : index
    %251 = vector.load %arg6[%c0_74, %c0_75, %c0_76] : memref<1x32x128xbf16, #tpu.memory_space<vmem>>, vector<1x32x128xbf16>
    %252 = vector.shape_cast %251 : vector<1x32x128xbf16> to vector<32x128xbf16>
    %cst_77 = arith.constant dense<0.000000e+00> : vector<8x128xf32>
    %253 = tpu.matmul %250, %252, %cst_77 {dimension_numbers = #tpu.dot_dimension_numbers<[1], [0], [0], [1], [0, 0, 1, 1], [], []>} : vector<8x32xbf16>, vector<32x128xbf16>, vector<8x128xf32> -> vector<8x128xf32>
    %254 = arith.addf %249, %253 : vector<8x128xf32>
    %255 = vector.extract_strided_slice %254 {offsets = [0, 0], sizes = [8, 32], strides = [1, 1]} : vector<8x128xf32> to vector<8x32xf32>
    %256 = arith.negf %255 : vector<8x32xf32>
    %257 = math.exp %256 : vector<8x32xf32>
    %cst_78 = arith.constant 1.000000e+00 : f32
    %258 = vector.broadcast %cst_78 : f32 to vector<8x32xf32>
    %259 = arith.addf %258, %257 : vector<8x32xf32>
    %260 = arith.divf %258, %259 : vector<8x32xf32>
    %261 = vector.extract_strided_slice %254 {offsets = [0, 32], sizes = [8, 32], strides = [1, 1]} : vector<8x128xf32> to vector<8x32xf32>
    %262 = arith.negf %261 : vector<8x32xf32>
    %263 = math.exp %262 : vector<8x32xf32>
    %cst_79 = arith.constant 1.000000e+00 : f32
    %264 = vector.broadcast %cst_79 : f32 to vector<8x32xf32>
    %265 = arith.addf %264, %263 : vector<8x32xf32>
    %266 = arith.divf %264, %265 : vector<8x32xf32>
    %267 = vector.extract_strided_slice %254 {offsets = [0, 64], sizes = [8, 32], strides = [1, 1]} : vector<8x128xf32> to vector<8x32xf32>
    %268 = math.tanh %267 : vector<8x32xf32>
    %269 = vector.extract_strided_slice %254 {offsets = [0, 96], sizes = [8, 32], strides = [1, 1]} : vector<8x128xf32> to vector<8x32xf32>
    %270 = arith.negf %269 : vector<8x32xf32>
    %271 = math.exp %270 : vector<8x32xf32>
    %cst_80 = arith.constant 1.000000e+00 : f32
    %272 = vector.broadcast %cst_80 : f32 to vector<8x32xf32>
    %273 = arith.addf %272, %271 : vector<8x32xf32>
    %274 = arith.divf %272, %273 : vector<8x32xf32>
    %275 = arith.mulf %266, %245 : vector<8x32xf32>
    %276 = arith.mulf %260, %268 : vector<8x32xf32>
    %277 = arith.addf %275, %276 : vector<8x32xf32>
    %278 = math.tanh %277 : vector<8x32xf32>
    %279 = arith.mulf %274, %278 : vector<8x32xf32>
    %280 = vector.broadcast %c6_i32 : i32 to vector<8x32xi32>
    %281 = arith.cmpi slt, %280, %13 : vector<8x32xi32>
    %282 = arith.select %281, %279, %244 : vector<8x32xi1>, vector<8x32xf32>
    %283 = arith.select %281, %277, %245 : vector<8x32xi1>, vector<8x32xf32>
    %c7_i32 = arith.constant 7 : i32
    %c8_i32_81 = arith.constant 8 : i32
    %284 = arith.muli %c7_i32, %c8_i32_81 : i32
    %285 = tpu.assume_multiple %284, 8 : i32
    %286 = arith.index_cast %285 : i32 to index
    %c0_82 = arith.constant 0 : index
    %287 = vector.load %arg10[%286, %c0_82] : memref<64x128xf32, #tpu.memory_space<vmem>>, vector<8x128xf32>
    %288 = arith.truncf %282 : vector<8x32xf32> to vector<8x32xbf16>
    %c0_83 = arith.constant 0 : index
    %c0_84 = arith.constant 0 : index
    %c0_85 = arith.constant 0 : index
    %289 = vector.load %arg6[%c0_83, %c0_84, %c0_85] : memref<1x32x128xbf16, #tpu.memory_space<vmem>>, vector<1x32x128xbf16>
    %290 = vector.shape_cast %289 : vector<1x32x128xbf16> to vector<32x128xbf16>
    %cst_86 = arith.constant dense<0.000000e+00> : vector<8x128xf32>
    %291 = tpu.matmul %288, %290, %cst_86 {dimension_numbers = #tpu.dot_dimension_numbers<[1], [0], [0], [1], [0, 0, 1, 1], [], []>} : vector<8x32xbf16>, vector<32x128xbf16>, vector<8x128xf32> -> vector<8x128xf32>
    %292 = arith.addf %287, %291 : vector<8x128xf32>
    %293 = vector.extract_strided_slice %292 {offsets = [0, 0], sizes = [8, 32], strides = [1, 1]} : vector<8x128xf32> to vector<8x32xf32>
    %294 = arith.negf %293 : vector<8x32xf32>
    %295 = math.exp %294 : vector<8x32xf32>
    %cst_87 = arith.constant 1.000000e+00 : f32
    %296 = vector.broadcast %cst_87 : f32 to vector<8x32xf32>
    %297 = arith.addf %296, %295 : vector<8x32xf32>
    %298 = arith.divf %296, %297 : vector<8x32xf32>
    %299 = vector.extract_strided_slice %292 {offsets = [0, 32], sizes = [8, 32], strides = [1, 1]} : vector<8x128xf32> to vector<8x32xf32>
    %300 = arith.negf %299 : vector<8x32xf32>
    %301 = math.exp %300 : vector<8x32xf32>
    %cst_88 = arith.constant 1.000000e+00 : f32
    %302 = vector.broadcast %cst_88 : f32 to vector<8x32xf32>
    %303 = arith.addf %302, %301 : vector<8x32xf32>
    %304 = arith.divf %302, %303 : vector<8x32xf32>
    %305 = vector.extract_strided_slice %292 {offsets = [0, 64], sizes = [8, 32], strides = [1, 1]} : vector<8x128xf32> to vector<8x32xf32>
    %306 = math.tanh %305 : vector<8x32xf32>
    %307 = vector.extract_strided_slice %292 {offsets = [0, 96], sizes = [8, 32], strides = [1, 1]} : vector<8x128xf32> to vector<8x32xf32>
    %308 = arith.negf %307 : vector<8x32xf32>
    %309 = math.exp %308 : vector<8x32xf32>
    %cst_89 = arith.constant 1.000000e+00 : f32
    %310 = vector.broadcast %cst_89 : f32 to vector<8x32xf32>
    %311 = arith.addf %310, %309 : vector<8x32xf32>
    %312 = arith.divf %310, %311 : vector<8x32xf32>
    %313 = arith.mulf %304, %283 : vector<8x32xf32>
    %314 = arith.mulf %298, %306 : vector<8x32xf32>
    %315 = arith.addf %313, %314 : vector<8x32xf32>
    %316 = math.tanh %315 : vector<8x32xf32>
    %317 = arith.mulf %312, %316 : vector<8x32xf32>
    %318 = vector.broadcast %c7_i32 : i32 to vector<8x32xi32>
    %319 = arith.cmpi slt, %318, %13 : vector<8x32xi32>
    %320 = arith.select %319, %317, %282 : vector<8x32xi1>, vector<8x32xf32>
    %321 = arith.select %319, %315, %283 : vector<8x32xi1>, vector<8x32xf32>
    %c8_i32_90 = arith.constant 8 : i32
    %c0_91 = arith.constant 0 : index
    %c0_92 = arith.constant 0 : index
    %c0_93 = arith.constant 0 : index
    %322 = vector.load %arg8[%c0_91, %c0_92, %c0_93] : memref<1x32x4xf32, #tpu.memory_space<vmem>>, vector<1x32x4xf32>
    %323 = vector.shape_cast %322 : vector<1x32x4xf32> to vector<32x4xf32>
    %cst_94 = arith.constant dense<0.000000e+00> : vector<8x4xf32>
    %324 = tpu.matmul %320, %323, %cst_94 {dimension_numbers = #tpu.dot_dimension_numbers<[1], [0], [0], [1], [0, 0, 1, 1], [], []>} : vector<8x32xf32>, vector<32x4xf32>, vector<8x4xf32> -> vector<8x4xf32>
    %c0_95 = arith.constant 0 : index
    %c0_96 = arith.constant 0 : index
    %c0_97 = arith.constant 0 : index
    %325 = vector.load %arg9[%c0_95, %c0_96, %c0_97] : memref<1x8x4xf32, #tpu.memory_space<vmem>>, vector<1x8x4xf32>
    %326 = vector.shape_cast %325 : vector<1x8x4xf32> to vector<8x4xf32>
    %327 = vector.shape_cast %324 : vector<8x4xf32> to vector<1x8x4xf32>
    tpu.vector_store %arg9[%c0_95, %c0_96, %c0_97], %327 {strides = array<i32>} : memref<1x8x4xf32, #tpu.memory_space<vmem>>, vector<1x8x4xf32>,
    return
  }
  func.func @transform_0(%arg0: i32) -> (i32, i32, i32) {
    %c0_i32 = arith.constant 0 : i32
    %c0_i32_0 = arith.constant 0 : i32
    %c0_i32_1 = arith.constant 0 : i32
    return %arg0, %c0_i32, %c0_i32_0 : i32, i32, i32
  }
  func.func @transform_1(%arg0: i32) -> (i32, i32, i32) {
    %c0_i32 = arith.constant 0 : i32
    %c0_i32_0 = arith.constant 0 : i32
    %c0_i32_1 = arith.constant 0 : i32
    return %arg0, %c0_i32, %c0_i32_0 : i32, i32, i32
  }
  func.func @transform_2(%arg0: i32) -> (i32, i32, i32) {
    %c0_i32 = arith.constant 0 : i32
    %c0_i32_0 = arith.constant 0 : i32
    %c0_i32_1 = arith.constant 0 : i32
    return %arg0, %c0_i32, %c0_i32_0 : i32, i32, i32
  }
  func.func @transform_3(%arg0: i32) -> (i32, i32, i32) {
    %c0_i32 = arith.constant 0 : i32
    %c0_i32_0 = arith.constant 0 : i32
    %c0_i32_1 = arith.constant 0 : i32
    return %arg0, %c0_i32, %c0_i32_0 : i32, i32, i32
  }
  func.func @transform_4(%arg0: i32) -> (i32, i32, i32) {
    %c0_i32 = arith.constant 0 : i32
    %c0_i32_0 = arith.constant 0 : i32
    %c0_i32_1 = arith.constant 0 : i32
    return %arg0, %c0_i32, %c0_i32_0 : i32, i32, i32
  }
  func.func @transform_5(%arg0: i32) -> (i32, i32, i32) {
    %c0_i32 = arith.constant 0 : i32
    %c0_i32_0 = arith.constant 0 : i32
    %c0_i32_1 = arith.constant 0 : i32
    return %arg0, %c0_i32, %c0_i32_0 : i32, i32, i32
  }
  func.func @transform_6(%arg0: i32) -> (i32, i32, i32) {
    %c0_i32 = arith.constant 0 : i32
    %c0_i32_0 = arith.constant 0 : i32
    %c0_i32_1 = arith.constant 0 : i32
    return %arg0, %c0_i32, %c0_i32_0 : i32, i32, i32
  }
  func.func @transform_7(%arg0: i32) -> (i32, i32, i32) {
    %c0_i32 = arith.constant 0 : i32
    %c0_i32_0 = arith.constant 0 : i32
    %c0_i32_1 = arith.constant 0 : i32
    return %arg0, %c0_i32, %c0_i32_0 : i32, i32, i32
  }
  func.func @transform_8(%arg0: i32) -> (i32, i32, i32) {
    %c0_i32 = arith.constant 0 : i32
    %c0_i32_0 = arith.constant 0 : i32
    %c0_i32_1 = arith.constant 0 : i32
    return %arg0, %c0_i32, %c0_i32_0 : i32, i32, i32
  }
}

</mosaic_0001>

<llo_original>
// kernel: forward.3
$region0: #{forward.3}
  #allocation0 [shape = 'u32[]', space=smem, size = 0x4, offset = 0x4, fixed_abs, tag = 'smem constant byte address 0x4 - core index']
  #allocation1 [shape = 'u32[144,128]{1,0:T(1,128)}', space=vmem, size = 0x12000, scoped, tag = 'internal scratch']
  #allocation2 [shape = 'f32[64,128]{1,0:T(8,128)}', space=vmem, size = 0x8000, scoped, tag = 'scratch operand']
  %s0 = inlined_call_operand.vmem [shape: bf16[2,64,16], index: 0, kind: input, shape index: {}]
  %s1 = inlined_call_operand.vmem [shape: s32[2,8,1], index: 1, kind: input, shape index: {}]
  %s2 = inlined_call_operand.vmem [shape: f32[2,8,32], index: 2, kind: input, shape index: {}]
  %s3 = inlined_call_operand.vmem [shape: f32[2,8,32], index: 3, kind: input, shape index: {}]
  %s4 = inlined_call_operand.vmem [shape: bf16[2,16,128], index: 4, kind: input, shape index: {}]
  %s5 = inlined_call_operand.vmem [shape: bf16[2,32,128], index: 5, kind: input, shape index: {}]
  %s6 = inlined_call_operand.vmem [shape: f32[2,1,128], index: 6, kind: input, shape index: {}]
  %s7 = inlined_call_operand.vmem [shape: f32[2,32,4], index: 7, kind: input, shape index: {}]
  %s8 = inlined_call_operand.vmem [shape: f32[2,8,4], index: 8, kind: output, shape index: {}]
  %s9 = sld [smem:[#allocation0]]
  $region65: #{forward.3} parent=0
    _
  %s11 = ssub.s32 1, %s9
  %s12 = scalar_select 0, %s11, %s9
  loop: start=0, step=1, limit=4
  $region2: #{forward.3} parent=0 // loop_pre_header
    _
  $region3: #{forward.3} parent=0 // loop_header
    %s14 = sphi 0, %s18
    %p15 = scmp.ge.s32.totalorder %s14, 4
    %s24 = sphi 0, %s26
    %s27 = sphi 0, %s24
    %s28 = sphi 0, %s27
    %s44 = sphi 0, %s28
    %s50 = sphi 0, %s52
    %s53 = sphi 0, %s50
    %s54 = sphi 0, %s53
    %s70 = sphi 0, %s54
    %s76 = sphi 0, %s78
    %s79 = sphi 0, %s76
    %s80 = sphi 0, %s79
    %s96 = sphi 0, %s80
    %s102 = sphi 0, %s104
    %s105 = sphi 0, %s102
    %s106 = sphi 0, %s105
    %s122 = sphi 0, %s106
    %s128 = sphi 0, %s130
    %s131 = sphi 0, %s128
    %s132 = sphi 0, %s131
    %s148 = sphi 0, %s132
    %s154 = sphi 0, %s156
    %s157 = sphi 0, %s154
    %s158 = sphi 0, %s157
    %s174 = sphi 0, %s158
    %s180 = sphi 0, %s182
    %s183 = sphi 0, %s180
    %s184 = sphi 0, %s183
    %s200 = sphi 0, %s184
    %s206 = sphi 0, %s208
    %s209 = sphi 0, %s206
    %s210 = sphi 0, %s209
    %s226 = sphi 0, %s210
    %s232 = sphi 0, %s234
    %s235 = sphi 0, %s232
    %s236 = sphi 0, %s235
    %s252 = sphi 0, %s236
  $region4: #{forward.3} parent=0 // loop_header_branch
    %17 = sbr.rel (%p15) target = $region8
  $region5: #{forward.3} parent=0 // loop_body
    %s19 = ssub.s32 %s14, 1
    %s20 = ssub.s32 %s14, 2
    %s21 = sadd.s32 %s14, 1
    %s22 = ssub.s32 %s14, %s21
    %p23 = scmp.eq.s32.totalorder %s22, 0
    %s25 = sadd.s32 %s24, 1
    %s26 = scalar_select %p23, %s24, %s25
    %p29 = pneg %p23
    %p30 = scmp.eq.s32.totalorder %s14, 1
    %p31 = por %p29, %p30
    %p32 = scmp.ne.s32.totalorder %s24, %s27
    %p33 = scmp.eq.s32.totalorder %s14, 0
    %p34 = por %p32, %p33
    %p35 = scmp.ne.s32.totalorder %s24, %s27
    %p36 = scmp.eq.s32.totalorder %s19, 1
    %p37 = por %p35, %p36
    %p38 = scmp.ne.s32.totalorder %s27, %s28
    %p39 = scmp.eq.s32.totalorder %s19, 0
    %p40 = por %p38, %p39
    %p41 = scmp.ne.s32.totalorder %s27, %s28
    %p42 = scmp.eq.s32.totalorder %s20, 1
    %p43 = por %p41, %p42
    %p45 = scmp.ne.s32.totalorder %s28, %s44
    %p46 = scmp.eq.s32.totalorder %s20, 0
    %p47 = por %p45, %p46
    %s48 = ssub.s32 %s14, %s21
    %p49 = scmp.eq.s32.totalorder %s48, 0
    %s51 = sadd.s32 %s50, 1
    %s52 = scalar_select %p49, %s50, %s51
    %p55 = pneg %p49
    %p56 = scmp.eq.s32.totalorder %s14, 1
    %p57 = por %p55, %p56
    %p58 = scmp.ne.s32.totalorder %s50, %s53
    %p59 = scmp.eq.s32.totalorder %s14, 0
    %p60 = por %p58, %p59
    %p61 = scmp.ne.s32.totalorder %s50, %s53
    %p62 = scmp.eq.s32.totalorder %s19, 1
    %p63 = por %p61, %p62
    %p64 = scmp.ne.s32.totalorder %s53, %s54
    %p65 = scmp.eq.s32.totalorder %s19, 0
    %p66 = por %p64, %p65
    %p67 = scmp.ne.s32.totalorder %s53, %s54
    %p68 = scmp.eq.s32.totalorder %s20, 1
    %p69 = por %p67, %p68
    %p71 = scmp.ne.s32.totalorder %s54, %s70
    %p72 = scmp.eq.s32.totalorder %s20, 0
    %p73 = por %p71, %p72
    %s74 = ssub.s32 %s14, %s21
    %p75 = scmp.eq.s32.totalorder %s74, 0
    %s77 = sadd.s32 %s76, 1
    %s78 = scalar_select %p75, %s76, %s77
    %p81 = pneg %p75
    %p82 = scmp.eq.s32.totalorder %s14, 1
    %p83 = por %p81, %p82
    %p84 = scmp.ne.s32.totalorder %s76, %s79
    %p85 = scmp.eq.s32.totalorder %s14, 0
    %p86 = por %p84, %p85
    %p87 = scmp.ne.s32.totalorder %s76, %s79
    %p88 = scmp.eq.s32.totalorder %s19, 1
    %p89 = por %p87, %p88
    %p90 = scmp.ne.s32.totalorder %s79, %s80
    %p91 = scmp.eq.s32.totalorder %s19, 0
    %p92 = por %p90, %p91
    %p93 = scmp.ne.s32.totalorder %s79, %s80
    %p94 = scmp.eq.s32.totalorder %s20, 1
    %p95 = por %p93, %p94
    %p97 = scmp.ne.s32.totalorder %s80, %s96
    %p98 = scmp.eq.s32.totalorder %s20, 0
    %p99 = por %p97, %p98
    %s100 = ssub.s32 %s14, %s21
    %p101 = scmp.eq.s32.totalorder %s100, 0
    %s103 = sadd.s32 %s102, 1
    %s104 = scalar_select %p101, %s102, %s103
    %p107 = pneg %p101
    %p108 = scmp.eq.s32.totalorder %s14, 1
    %p109 = por %p107, %p108
    %p110 = scmp.ne.s32.totalorder %s102, %s105
    %p111 = scmp.eq.s32.totalorder %s14, 0
    %p112 = por %p110, %p111
    %p113 = scmp.ne.s32.totalorder %s102, %s105
    %p114 = scmp.eq.s32.totalorder %s19, 1
    %p115 = por %p113, %p114
    %p116 = scmp.ne.s32.totalorder %s105, %s106
    %p117 = scmp.eq.s32.totalorder %s19, 0
    %p118 = por %p116, %p117
    %p119 = scmp.ne.s32.totalorder %s105, %s106
    %p120 = scmp.eq.s32.totalorder %s20, 1
    %p121 = por %p119, %p120
    %p123 = scmp.ne.s32.totalorder %s106, %s122
    %p124 = scmp.eq.s32.totalorder %s20, 0
    %p125 = por %p123, %p124
    %s126 = ssub.s32 %s14, %s21
    %p127 = scmp.eq.s32.totalorder %s126, 0
    %s129 = sadd.s32 %s128, 1
    %s130 = scalar_select %p127, %s128, %s129
    %p133 = pneg %p127
    %p134 = scmp.eq.s32.totalorder %s14, 1
    %p135 = por %p133, %p134
    %p136 = scmp.ne.s32.totalorder %s128, %s131
    %p137 = scmp.eq.s32.totalorder %s14, 0
    %p138 = por %p136, %p137
    %p139 = scmp.ne.s32.totalorder %s128, %s131
    %p140 = scmp.eq.s32.totalorder %s19, 1
    %p141 = por %p139, %p140
    %p142 = scmp.ne.s32.totalorder %s131, %s132
    %p143 = scmp.eq.s32.totalorder %s19, 0
    %p144 = por %p142, %p143
    %p145 = scmp.ne.s32.totalorder %s131, %s132
    %p146 = scmp.eq.s32.totalorder %s20, 1
    %p147 = por %p145, %p146
    %p149 = scmp.ne.s32.totalorder %s132, %s148
    %p150 = scmp.eq.s32.totalorder %s20, 0
    %p151 = por %p149, %p150
    %s152 = ssub.s32 %s14, %s21
    %p153 = scmp.eq.s32.totalorder %s152, 0
    %s155 = sadd.s32 %s154, 1
    %s156 = scalar_select %p153, %s154, %s155
    %p159 = pneg %p153
    %p160 = scmp.eq.s32.totalorder %s14, 1
    %p161 = por %p159, %p160
    %p162 = scmp.ne.s32.totalorder %s154, %s157
    %p163 = scmp.eq.s32.totalorder %s14, 0
    %p164 = por %p162, %p163
    %p165 = scmp.ne.s32.totalorder %s154, %s157
    %p166 = scmp.eq.s32.totalorder %s19, 1
    %p167 = por %p165, %p166
    %p168 = scmp.ne.s32.totalorder %s157, %s158
    %p169 = scmp.eq.s32.totalorder %s19, 0
    %p170 = por %p168, %p169
    %p171 = scmp.ne.s32.totalorder %s157, %s158
    %p172 = scmp.eq.s32.totalorder %s20, 1
    %p173 = por %p171, %p172
    %p175 = scmp.ne.s32.totalorder %s158, %s174
    %p176 = scmp.eq.s32.totalorder %s20, 0
    %p177 = por %p175, %p176
    %s178 = ssub.s32 %s14, %s21
    %p179 = scmp.eq.s32.totalorder %s178, 0
    %s181 = sadd.s32 %s180, 1
    %s182 = scalar_select %p179, %s180, %s181
    %p185 = pneg %p179
    %p186 = scmp.eq.s32.totalorder %s14, 1
    %p187 = por %p185, %p186
    %p188 = scmp.ne.s32.totalorder %s180, %s183
    %p189 = scmp.eq.s32.totalorder %s14, 0
    %p190 = por %p188, %p189
    %p191 = scmp.ne.s32.totalorder %s180, %s183
    %p192 = scmp.eq.s32.totalorder %s19, 1
    %p193 = por %p191, %p192
    %p194 = scmp.ne.s32.totalorder %s183, %s184
    %p195 = scmp.eq.s32.totalorder %s19, 0
    %p196 = por %p194, %p195
    %p197 = scmp.ne.s32.totalorder %s183, %s184
    %p198 = scmp.eq.s32.totalorder %s20, 1
    %p199 = por %p197, %p198
    %p201 = scmp.ne.s32.totalorder %s184, %s200
    %p202 = scmp.eq.s32.totalorder %s20, 0
    %p203 = por %p201, %p202
    %s204 = ssub.s32 %s14, %s21
    %p205 = scmp.eq.s32.totalorder %s204, 0
    %s207 = sadd.s32 %s206, 1
    %s208 = scalar_select %p205, %s206, %s207
    %p211 = pneg %p205
    %p212 = scmp.eq.s32.totalorder %s14, 1
    %p213 = por %p211, %p212
    %p214 = scmp.ne.s32.totalorder %s206, %s209
    %p215 = scmp.eq.s32.totalorder %s14, 0
    %p216 = por %p214, %p215
    %p217 = scmp.ne.s32.totalorder %s206, %s209
    %p218 = scmp.eq.s32.totalorder %s19, 1
    %p219 = por %p217, %p218
    %p220 = scmp.ne.s32.totalorder %s209, %s210
    %p221 = scmp.eq.s32.totalorder %s19, 0
    %p222 = por %p220, %p221
    %p223 = scmp.ne.s32.totalorder %s209, %s210
    %p224 = scmp.eq.s32.totalorder %s20, 1
    %p225 = por %p223, %p224
    %p227 = scmp.ne.s32.totalorder %s210, %s226
    %p228 = scmp.eq.s32.totalorder %s20, 0
    %p229 = por %p227, %p228
    %s230 = ssub.s32 %s14, %s21
    %p231 = scmp.eq.s32.totalorder %s230, 0
    %s233 = sadd.s32 %s232, 1
    %s234 = scalar_select %p231, %s232, %s233
    %p237 = pneg %p231
    %p238 = scmp.eq.s32.totalorder %s14, 1
    %p239 = por %p237, %p238
    %p240 = scmp.ne.s32.totalorder %s232, %s235
    %p241 = scmp.eq.s32.totalorder %s14, 0
    %p242 = por %p240, %p241
    %p243 = scmp.ne.s32.totalorder %s232, %s235
    %p244 = scmp.eq.s32.totalorder %s19, 1
    %p245 = por %p243, %p244
    %p246 = scmp.ne.s32.totalorder %s235, %s236
    %p247 = scmp.eq.s32.totalorder %s19, 0
    %p248 = por %p246, %p247
    %p249 = scmp.ne.s32.totalorder %s235, %s236
    %p250 = scmp.eq.s32.totalorder %s20, 1
    %p251 = por %p249, %p250
    %p253 = scmp.ne.s32.totalorder %s236, %s252
    %p254 = scmp.eq.s32.totalorder %s20, 0
    %p255 = por %p253, %p254
    %p256 = scmp.le.s32.totalorder 1, %s14
    %p257 = scmp.lt.s32.totalorder %s14, 3
    %p258 = pnand %p256, %p257
    %p259 = pneg %p258
    // Predicated region
    $region9: #{forward.3} parent=5 // pred_check
      _
    $region10: #{forward.3} parent=5 // pred_check_branch
      %261 = sbr.rel (%p258) target = $region12
    $region11: #{forward.3} parent=5 // pred_region
      %s262 = ssub.s32 %s14, 1
    $region12: #{forward.3} parent=5 // pred_fallthru
      _
    %p263 = scmp.lt.s32.totalorder %s14, 2
    // Predicated region
    $region13: #{forward.3} parent=5 // pred_check
      %p264 = pneg %p263
    $region14: #{forward.3} parent=5 // pred_check_branch
      %266 = sbr.rel (%p264) target = $region16
    $region15: #{forward.3} parent=5 // pred_region
      // Predicated region
      $region17: #{forward.3} parent=15 // pred_check
        %p267 = pneg %p34
      $region18: #{forward.3} parent=15 // pred_check_branch
        %269 = sbr.rel (%p267) target = $region20
      $region19: #{forward.3} parent=15 // pred_region
        %p270 = scmp.lt.s32.totalorder %s14, 1
        %s271 = scalar_select %p270, %s14, 1
        %s272 = smul.addr %s271, 8
        %s273 = smul.addr %s272, 4
        %s274 = scalar_lea.vmem %s0, %s273
      $region20: #{forward.3} parent=15 // pred_fallthru
        _
      // Predicated region
      $region21: #{forward.3} parent=15 // pred_check
        %p275 = pneg %p60
      $region22: #{forward.3} parent=15 // pred_check_branch
        %277 = sbr.rel (%p275) target = $region24
      $region23: #{forward.3} parent=15 // pred_region
        %p278 = scmp.lt.s32.totalorder %s14, 1
        %s279 = scalar_select %p278, %s14, 1
        %s280 = smul.addr %s279, 8
        %s281 = scalar_lea.vmem %s1, %s280
      $region24: #{forward.3} parent=15 // pred_fallthru
        _
      // Predicated region
      $region25: #{forward.3} parent=15 // pred_check
        %p282 = pneg %p86
      $region26: #{forward.3} parent=15 // pred_check_branch
        %284 = sbr.rel (%p282) target = $region28
      $region27: #{forward.3} parent=15 // pred_region
        %p285 = scmp.lt.s32.totalorder %s14, 1
        %s286 = scalar_select %p285, %s14, 1
        %s287 = smul.addr %s286, 8
        %s288 = scalar_lea.vmem %s2, %s287
      $region28: #{forward.3} parent=15 // pred_fallthru
        _
      // Predicated region
      $region29: #{forward.3} parent=15 // pred_check
        %p289 = pneg %p112
      $region30: #{forward.3} parent=15 // pred_check_branch
        %291 = sbr.rel (%p289) target = $region32
      $region31: #{forward.3} parent=15 // pred_region
        %p292 = scmp.lt.s32.totalorder %s14, 1
        %s293 = scalar_select %p292, %s14, 1
        %s294 = smul.addr %s293, 8
        %s295 = scalar_lea.vmem %s3, %s294
      $region32: #{forward.3} parent=15 // pred_fallthru
        _
      // Predicated region
      $region33: #{forward.3} parent=15 // pred_check
        %p296 = pneg %p138
      $region34: #{forward.3} parent=15 // pred_check_branch
        %298 = sbr.rel (%p296) target = $region36
      $region35: #{forward.3} parent=15 // pred_region
        %p299 = scmp.lt.s32.totalorder %s14, 1
        %s300 = scalar_select %p299, %s14, 1
        %s301 = smul.addr %s300, 2
        %s302 = smul.addr %s301, 4
        %s303 = scalar_lea.vmem %s4, %s302
      $region36: #{forward.3} parent=15 // pred_fallthru
        _
      // Predicated region
      $region37: #{forward.3} parent=15 // pred_check
        %p304 = pneg %p164
      $region38: #{forward.3} parent=15 // pred_check_branch
        %306 = sbr.rel (%p304) target = $region40
      $region39: #{forward.3} parent=15 // pred_region
        %p307 = scmp.lt.s32.totalorder %s14, 1
        %s308 = scalar_select %p307, %s14, 1
        %s309 = smul.addr %s308, 4
        %s310 = smul.addr %s309, 4
        %s311 = scalar_lea.vmem %s5, %s310
      $region40: #{forward.3} parent=15 // pred_fallthru
        _
      // Predicated region
      $region41: #{forward.3} parent=15 // pred_check
        %p312 = pneg %p190
      $region42: #{forward.3} parent=15 // pred_check_branch
        %314 = sbr.rel (%p312) target = $region44
      $region43: #{forward.3} parent=15 // pred_region
        %p315 = scmp.lt.s32.totalorder %s14, 1
        %s316 = scalar_select %p315, %s14, 1
        %s317 = scalar_lea.vmem %s6, %s316
      $region44: #{forward.3} parent=15 // pred_fallthru
        _
      // Predicated region
      $region45: #{forward.3} parent=15 // pred_check
        %p318 = pneg %p216
      $region46: #{forward.3} parent=15 // pred_check_branch
        %320 = sbr.rel (%p318) target = $region48
      $region47: #{forward.3} parent=15 // pred_region
        %p321 = scmp.lt.s32.totalorder %s14, 1
        %s322 = scalar_select %p321, %s14, 1
        %s323 = smul.addr %s322, 4
        %s324 = smul.addr %s323, 8
        %s325 = scalar_lea.vmem %s7, %s324
      $region48: #{forward.3} parent=15 // pred_fallthru
        _
    $region16: #{forward.3} parent=5 // pred_fallthru
      _
    %p326 = scmp.le.s32.totalorder 1, %s14
    %p327 = scmp.lt.s32.totalorder %s14, 3
    %p328 = pnand %p326, %p327
    %p329 = pneg %p328
    // Predicated region
    $region49: #{forward.3} parent=5 // pred_check
      _
    $region50: #{forward.3} parent=5 // pred_check_branch
      %331 = sbr.rel (%p328) target = $region52
    $region51: #{forward.3} parent=5 // pred_region
      %s332 = ssub.s32 %s14, 1
      %p333 = scmp.lt.s32.totalorder %s19, 1
      %s334 = scalar_select %p333, %s19, 1
      %s335 = smul.addr %s334, 8
      %s336 = smul.addr %s335, 4
      %s337 = scalar_lea.vmem %s0, %s336
      %p338 = pneg %p40
      %p339 = pneg %p37
      %p340 = scmp.lt.s32.totalorder %s19, 1
      %s341 = scalar_select %p340, %s19, 1
      %s342 = smul.addr %s341, 8
      %s343 = scalar_lea.vmem %s1, %s342
      %p344 = pneg %p66
      %p345 = pneg %p63
      %p346 = scmp.lt.s32.totalorder %s19, 1
      %s347 = scalar_select %p346, %s19, 1
      %s348 = smul.addr %s347, 8
      %s349 = scalar_lea.vmem %s2, %s348
      %p350 = pneg %p92
      %p351 = pneg %p89
      %p352 = scmp.lt.s32.totalorder %s19, 1
      %s353 = scalar_select %p352, %s19, 1
      %s354 = smul.addr %s353, 8
      %s355 = scalar_lea.vmem %s3, %s354
      %p356 = pneg %p118
      %p357 = pneg %p115
      %p358 = scmp.lt.s32.totalorder %s19, 1
      %s359 = scalar_select %p358, %s19, 1
      %s360 = smul.addr %s359, 2
      %s361 = smul.addr %s360, 4
      %s362 = scalar_lea.vmem %s4, %s361
      %p363 = pneg %p144
      %p364 = pneg %p141
      %p365 = scmp.lt.s32.totalorder %s19, 1
      %s366 = scalar_select %p365, %s19, 1
      %s367 = smul.addr %s366, 4
      %s368 = smul.addr %s367, 4
      %s369 = scalar_lea.vmem %s5, %s368
      %p370 = pneg %p170
      %p371 = pneg %p167
      %p372 = scmp.lt.s32.totalorder %s19, 1
      %s373 = scalar_select %p372, %s19, 1
      %s374 = scalar_lea.vmem %s6, %s373
      %p375 = pneg %p196
      %p376 = pneg %p193
      %p377 = scmp.lt.s32.totalorder %s19, 1
      %s378 = scalar_select %p377, %s19, 1
      %s379 = smul.addr %s378, 4
      %s380 = smul.addr %s379, 8
      %s381 = scalar_lea.vmem %s7, %s380
      %p382 = pneg %p222
      %p383 = pneg %p219
      %p384 = pneg %p248
      %p385 = pneg %p245
      %p386 = scmp.lt.s32.totalorder %s19, 1
      %s387 = scalar_select %p386, %s19, 1
      %s388 = smul.addr %s387, 8
      %s389 = scalar_lea.vmem %s8, %s388
      %p390 = scmp.lt.s32.totalorder %s19, 1
      %s391 = scalar_select %p390, %s19, 1
      %s392 = smul.addr %s391, 8
      %s393 = smul.addr %s392, 4
      %s394 = scalar_lea.vmem %s0, %s393
      %p395 = scmp.lt.s32.totalorder %s19, 1
      %s396 = scalar_select %p395, %s19, 1
      %s397 = smul.addr %s396, 8
      %s398 = scalar_lea.vmem %s1, %s397
      %p399 = scmp.lt.s32.totalorder %s19, 1
      %s400 = scalar_select %p399, %s19, 1
      %s401 = smul.addr %s400, 8
      %s402 = scalar_lea.vmem %s2, %s401
      %p403 = scmp.lt.s32.totalorder %s19, 1
      %s404 = scalar_select %p403, %s19, 1
      %s405 = smul.addr %s404, 8
      %s406 = scalar_lea.vmem %s3, %s405
      %p407 = scmp.lt.s32.totalorder %s19, 1
      %s408 = scalar_select %p407, %s19, 1
      %s409 = smul.addr %s408, 2
      %s410 = smul.addr %s409, 4
      %s411 = scalar_lea.vmem %s4, %s410
      %p412 = scmp.lt.s32.totalorder %s19, 1
      %s413 = scalar_select %p412, %s19, 1
      %s414 = smul.addr %s413, 4
      %s415 = smul.addr %s414, 4
      %s416 = scalar_lea.vmem %s5, %s415
      %p417 = scmp.lt.s32.totalorder %s19, 1
      %s418 = scalar_select %p417, %s19, 1
      %s419 = scalar_lea.vmem %s6, %s418
      %p420 = scmp.lt.s32.totalorder %s19, 1
      %s421 = scalar_select %p420, %s19, 1
      %s422 = smul.addr %s421, 4
      %s423 = smul.addr %s422, 8
      %s424 = scalar_lea.vmem %s7, %s423
      %p425 = scmp.lt.s32.totalorder %s19, 1
      %s426 = scalar_select %p425, %s19, 1
      %s427 = smul.addr %s426, 8
      %s428 = scalar_lea.vmem %s8, %s427
      %v430 = vld [vmem:[%s394] sm:$0xf]
      %v431 = vld [vmem:[%s394 + $0x4] sm:$0xf]
      %v432 = vld [vmem:[%s394 + $0x8] sm:$0xf]
      %v433 = vld [vmem:[%s394 + $0xc] sm:$0xf]
      %v434 = vld [vmem:[%s394 + $0x10] sm:$0xf]
      %v435 = vld [vmem:[%s394 + $0x14] sm:$0xf]
      %v436 = vld [vmem:[%s394 + $0x18] sm:$0xf]
      %v437 = vld [vmem:[%s394 + $0x1c] sm:$0xf]
      %v438 = vld [vmem:[%s411] sm:$0xf]
      %v439 = vld [vmem:[%s411 + $0x4] sm:$0xf]
      %v440 = vld [vmem:[%s419] sm:$0x1]
      %v442 = vlaneseq
      %v443 = vshrl.u32 %v442, 7
      %v444 = vsub.s32 0, %v443
      %v445 = vrot.slane %v440, %v444
      %v455 = vunpack.c.l.b16 %v430
      %v456 = vunpack.c.l.b16 %v431
      %v457 = vunpack.c.l.b16 %v432
      %v458 = vunpack.c.l.b16 %v433
      %v459 = vunpack.c.l.b16 %v434
      %v460 = vunpack.c.l.b16 %v435
      %v461 = vunpack.c.l.b16 %v436
      %v462 = vunpack.c.l.b16 %v437
      %v463 = vpack.c.b16 %v456, %v455
      %v464 = vpack.c.b16 %v458, %v457
      %v465 = vpack.c.b16 %v460, %v459
      %v466 = vpack.c.b16 %v462, %v461
      %v469 = vunpack.c.l.b16 %v438
      %v470 = vunpack.c.l.b16 %v439
      %v471 = vpack.c.b16 %v470, %v469
      %vm473 = vcmask 130048
      %v475 = vsel %vm473, %v463, 0
      %v478 = vsel %vm473, %v464, 0
      %v481 = vsel %vm473, %v465, 0
      %v484 = vsel %vm473, %v466, 0
      %486 = vmatprep.subr.bf16.mxu0 0
      %487 = vmatpush1.bf16.msra.mxu0 %v471
      %488 = vmatprep.subr.bf16.mxu0 0
      %489 = vmatpush1.bf16.msra.mxu0 0
      %490 = vmatprep.subr.bf16.mxu0 0
      %491 = vmatpush1.bf16.msra.mxu0 0
      %492 = vmatprep.subr.bf16.mxu0 0
      %493 = vmatpush1.bf16.msra.mxu0 0
      %494 = vmatprep.subr.bf16.mxu0 0
      %495 = vmatpush1.bf16.msra.mxu0 0
      %496 = vmatprep.subr.bf16.mxu0 0
      %497 = vmatpush1.bf16.msra.mxu0 0
      %498 = vmatprep.subr.bf16.mxu0 0
      %499 = vmatpush1.bf16.msra.mxu0 0
      %500 = vmatprep.subr.bf16.mxu0 0
      %501 = vmatpush1.bf16.msra.mxu0 0
      %502 = vmatprep.subr.bf16.mxu0 0
      %503 = vmatpush1.bf16.msra.mxu0 0
      %504 = vmatprep.subr.bf16.mxu0 0
      %505 = vmatpush1.bf16.msra.mxu0 0
      %506 = vmatprep.subr.bf16.mxu0 0
      %507 = vmatpush1.bf16.msra.mxu0 0
      %508 = vmatprep.subr.bf16.mxu0 0
      %509 = vmatpush1.bf16.msra.mxu0 0
      %510 = vmatprep.subr.bf16.mxu0 0
      %511 = vmatpush1.bf16.msra.mxu0 0
      %512 = vmatprep.subr.bf16.mxu0 0
      %513 = vmatpush1.bf16.msra.mxu0 0
      %514 = vmatprep.subr.bf16.mxu0 0
      %515 = vmatpush1.bf16.msra.mxu0 0
      %516 = vmatprep.subr.bf16.mxu0 0
      %517 = vmatpush1.bf16.msra.mxu0 0
      %518 = vmatprep.mubr.bf16.mxu0 0
      %519 = vmatmul.mubr.bf16.gmra.mrb[0].mxu0 %v475
      %v520 = vpop.f32.mrb[0].mxu0
      %v521 = vadd.f32 %v445, %v520
      %v522 = vpop.f32.mrb[0].mxu0
      %v523 = vpop.f32.mrb[0].mxu0
      %v524 = vadd.f32 %v445, %v523
      %v525 = vpop.f32.mrb[0].mxu0
      %526 = vmatprep.mubr.bf16.mxu0 0
      %527 = vmatmul.mubr.bf16.gmra.mrb[0].mxu0 %v478
      %v528 = vpop.f32.mrb[0].mxu0
      %v529 = vadd.f32 %v445, %v528
      %v530 = vpop.f32.mrb[0].mxu0
      %v531 = vpop.f32.mrb[0].mxu0
      %v532 = vadd.f32 %v445, %v531
      %v533 = vpop.f32.mrb[0].mxu0
      %534 = vmatprep.mubr.bf16.mxu0 0
      %535 = vmatmul.mubr.bf16.gmra.mrb[0].mxu0 %v481
      %v536 = vpop.f32.mrb[0].mxu0
      %v537 = vadd.f32 %v445, %v536
      %v538 = vpop.f32.mrb[0].mxu0
      %v539 = vpop.f32.mrb[0].mxu0
      %v540 = vadd.f32 %v445, %v539
      %v541 = vpop.f32.mrb[0].mxu0
      %542 = vmatprep.mubr.bf16.mxu0 0
      %543 = vmatmul.mubr.bf16.gmra.mrb[0].mxu0 %v484
      %v544 = vpop.f32.mrb[0].mxu0
      %v545 = vadd.f32 %v445, %v544
      %v546 = vpop.f32.mrb[0].mxu0
      %v547 = vpop.f32.mrb[0].mxu0
      %v548 = vadd.f32 %v445, %v547
      %v549 = vpop.f32.mrb[0].mxu0
      %550 = vdwg.mxu0
      %551 = vst [vmem:[#allocation2] sm:$0xff] %v521
      %552 = vst [vmem:[#allocation2 + $0x8] sm:$0xff] %v524
      %553 = vst [vmem:[#allocation2 + $0x10] sm:$0xff] %v529
      %554 = vst [vmem:[#allocation2 + $0x18] sm:$0xff] %v532
      %555 = vst [vmem:[#allocation2 + $0x20] sm:$0xff] %v537
      %556 = vst [vmem:[#allocation2 + $0x28] sm:$0xff] %v540
      %557 = vst [vmem:[#allocation2 + $0x30] sm:$0xff] %v545
      %558 = vst [vmem:[#allocation2 + $0x38] sm:$0xff] %v548
      %v559 = vld [vmem:[%s398] sm:$0xff]
      %560 = vset.pattern.permute.xlu0 0
      %561 = vperm.xlu0 %560, %v559
      %v562 = vpop.permute.xlu0 %561
      %v563 = vld [vmem:[%s402] sm:$0xff]
      %v564 = vld [vmem:[%s406] sm:$0xff]
      %v565 = vld [vmem:[#allocation2] sm:$0xff]
      %v566 = vpack.c.bf16 %v563, %v563
      %v567 = vld [vmem:[%s416] sm:$0xf]
      %v568 = vld [vmem:[%s416 + $0x4] sm:$0xf]
      %v569 = vld [vmem:[%s416 + $0x8] sm:$0xf]
      %v570 = vld [vmem:[%s416 + $0xc] sm:$0xf]
      %v575 = vunpack.c.l.b16 %v567
      %v576 = vunpack.c.l.b16 %v568
      %v577 = vunpack.c.l.b16 %v569
      %v578 = vunpack.c.l.b16 %v570
      %v579 = vpack.c.b16 %v576, %v575
      %v580 = vpack.c.b16 %v578, %v577
      %vm583 = vcmask 261120
      %v585 = vsel %vm583, %v566, 0
      %587 = vmatprep.subr.bf16.mxu0 0
      %588 = vmatpush1.bf16.msra.mxu0 %v579
      %589 = vmatprep.subr.bf16.mxu0 0
      %590 = vmatpush1.bf16.msra.mxu0 %v580
      %591 = vmatprep.subr.bf16.mxu0 0
      %592 = vmatpush1.bf16.msra.mxu0 0
      %593 = vmatprep.subr.bf16.mxu0 0
      %594 = vmatpush1.bf16.msra.mxu0 0
      %595 = vmatprep.subr.bf16.mxu0 0
      %596 = vmatpush1.bf16.msra.mxu0 0
      %597 = vmatprep.subr.bf16.mxu0 0
      %598 = vmatpush1.bf16.msra.mxu0 0
      %599 = vmatprep.subr.bf16.mxu0 0
      %600 = vmatpush1.bf16.msra.mxu0 0
      %601 = vmatprep.subr.bf16.mxu0 0
      %602 = vmatpush1.bf16.msra.mxu0 0
      %603 = vmatprep.subr.bf16.mxu0 0
      %604 = vmatpush1.bf16.msra.mxu0 0
      %605 = vmatprep.subr.bf16.mxu0 0
      %606 = vmatpush1.bf16.msra.mxu0 0
      %607 = vmatprep.subr.bf16.mxu0 0
      %608 = vmatpush1.bf16.msra.mxu0 0
      %609 = vmatprep.subr.bf16.mxu0 0
      %610 = vmatpush1.bf16.msra.mxu0 0
      %611 = vmatprep.subr.bf16.mxu0 0
      %612 = vmatpush1.bf16.msra.mxu0 0
      %613 = vmatprep.subr.bf16.mxu0 0
      %614 = vmatpush1.bf16.msra.mxu0 0
      %615 = vmatprep.subr.bf16.mxu0 0
      %616 = vmatpush1.bf16.msra.mxu0 0
      %617 = vmatprep.subr.bf16.mxu0 0
      %618 = vmatpush1.bf16.msra.mxu0 0
      %619 = vmatprep.mubr.bf16.mxu0 0
      %620 = vmatmul.mubr.bf16.gmra.mrb[0].mxu0 %v585
      %v621 = vpop.f32.mrb[0].mxu0
      %v622 = vadd.f32 0.0, %v621
      %v623 = vpop.f32.mrb[0].mxu0
      %v624 = vpop.f32.mrb[0].mxu0
      %v625 = vpop.f32.mrb[0].mxu0
      %626 = vdwg.mxu0
      %v627 = vadd.f32 %v565, %v622
      %v628 = vxor.u32 %v627, 2147483648
      %v629 = vmul.f32 %v628, 1.442695
      %v630 = vpow.pop %v629
      %v631 = vadd.f32 %v630, 1.0
      %v632 = vrcp.pop %v631
      %v633 = vmul.f32 1.0, %v632
      %v634 = vtanh.pop %v627
      %636 = vrot.lane.b32.xlu0 %v564, 32
      %v637 = vpop.permute.xlu0 %636
      %v639 = vmul.f32 %v633, %v637
      %641 = vrot.lane.b32.xlu0 %v634, 64
      %v642 = vpop.permute.xlu0 %641
      %v644 = vmul.f32 %v633, %v642
      %646 = vrot.lane.b32.xlu0 %v644, 32
      %v647 = vpop.permute.xlu0 %646
      %v649 = vadd.f32 %v639, %v647
      %v650 = vtanh.pop %v649
      %652 = vrot.lane.b32.xlu0 %v650, 64
      %v653 = vpop.permute.xlu0 %652
      %v655 = vmul.f32 %v633, %v653
      %vm656 = vcmp.gt.s32.totalorder %v562, 0
      %658 = vrot.lane.b32.xlu0 %v563, 96
      %v659 = vpop.permute.xlu0 %658
      %v661 = vsel %vm656, %v655, %v659
      %v662 = vsel %vm656, %v649, %v637
      %s663 = scalar_lea.vmem [#allocation2], 8
      %v664 = vld [vmem:[%s663] sm:$0xff]
      %v665 = vpack.c.bf16 %v661, %v661
      %667 = vrot.lane.b32.xlu0 %v665, 32
      %v668 = vpop.permute.xlu0 %667
      %v670 = vsel %vm583, %v668, 0
      %672 = vmatprep.subr.bf16.mxu0 0
      %673 = vmatpush1.bf16.msra.mxu0 %v579
      %674 = vmatprep.subr.bf16.mxu0 0
      %675 = vmatpush1.bf16.msra.mxu0 %v580
      %676 = vmatprep.subr.bf16.mxu0 0
      %677 = vmatpush1.bf16.msra.mxu0 0
      %678 = vmatprep.subr.bf16.mxu0 0
      %679 = vmatpush1.bf16.msra.mxu0 0
      %680 = vmatprep.subr.bf16.mxu0 0
      %681 = vmatpush1.bf16.msra.mxu0 0
      %682 = vmatprep.subr.bf16.mxu0 0
      %683 = vmatpush1.bf16.msra.mxu0 0
      %684 = vmatprep.subr.bf16.mxu0 0
      %685 = vmatpush1.bf16.msra.mxu0 0
      %686 = vmatprep.subr.bf16.mxu0 0
      %687 = vmatpush1.bf16.msra.mxu0 0
      %688 = vmatprep.subr.bf16.mxu0 0
      %689 = vmatpush1.bf16.msra.mxu0 0
      %690 = vmatprep.subr.bf16.mxu0 0
      %691 = vmatpush1.bf16.msra.mxu0 0
      %692 = vmatprep.subr.bf16.mxu0 0
      %693 = vmatpush1.bf16.msra.mxu0 0
      %694 = vmatprep.subr.bf16.mxu0 0
      %695 = vmatpush1.bf16.msra.mxu0 0
      %696 = vmatprep.subr.bf16.mxu0 0
      %697 = vmatpush1.bf16.msra.mxu0 0
      %698 = vmatprep.subr.bf16.mxu0 0
      %699 = vmatpush1.bf16.msra.mxu0 0
      %700 = vmatprep.subr.bf16.mxu0 0
      %701 = vmatpush1.bf16.msra.mxu0 0
      %702 = vmatprep.subr.bf16.mxu0 0
      %703 = vmatpush1.bf16.msra.mxu0 0
      %704 = vmatprep.mubr.bf16.mxu0 0
      %705 = vmatmul.mubr.bf16.gmra.mrb[0].mxu0 %v670
      %v706 = vpop.f32.mrb[0].mxu0
      %v707 = vadd.f32 0.0, %v706
      %v708 = vpop.f32.mrb[0].mxu0
      %v709 = vpop.f32.mrb[0].mxu0
      %v710 = vpop.f32.mrb[0].mxu0
      %711 = vdwg.mxu0
      %v712 = vadd.f32 %v664, %v707
      %v713 = vxor.u32 %v712, 2147483648
      %v714 = vmul.f32 %v713, 1.442695
      %v715 = vpow.pop %v714
      %v716 = vadd.f32 %v715, 1.0
      %v717 = vrcp.pop %v716
      %v718 = vmul.f32 1.0, %v717
      %v719 = vtanh.pop %v712
      %v720 = vmul.f32 %v718, %v662
      %722 = vrot.lane.b32.xlu0 %v719, 64
      %v723 = vpop.permute.xlu0 %722
      %v725 = vmul.f32 %v718, %v723
      %727 = vrot.lane.b32.xlu0 %v725, 32
      %v728 = vpop.permute.xlu0 %727
      %v730 = vadd.f32 %v720, %v728
      %v731 = vtanh.pop %v730
      %733 = vrot.lane.b32.xlu0 %v731, 64
      %v734 = vpop.permute.xlu0 %733
      %v736 = vmul.f32 %v718, %v734
      %vm737 = vcmp.gt.s32.totalorder %v562, 1
      %v738 = vsel %vm737, %v736, %v661
      %v739 = vsel %vm737, %v730, %v662
      %s740 = scalar_lea.vmem [#allocation2], 16
      %v741 = vld [vmem:[%s740] sm:$0xff]
      %v742 = vpack.c.bf16 %v738, %v738
      %744 = vrot.lane.b32.xlu0 %v742, 32
      %v745 = vpop.permute.xlu0 %744
      %v747 = vsel %vm583, %v745, 0
      %749 = vmatprep.subr.bf16.mxu0 0
      %750 = vmatpush1.bf16.msra.mxu0 %v579
      %751 = vmatprep.subr.bf16.mxu0 0
      %752 = vmatpush1.bf16.msra.mxu0 %v580
      %753 = vmatprep.subr.bf16.mxu0 0
      %754 = vmatpush1.bf16.msra.mxu0 0
      %755 = vmatprep.subr.bf16.mxu0 0
      %756 = vmatpush1.bf16.msra.mxu0 0
      %757 = vmatprep.subr.bf16.mxu0 0
      %758 = vmatpush1.bf16.msra.mxu0 0
      %759 = vmatprep.subr.bf16.mxu0 0
      %760 = vmatpush1.bf16.msra.mxu0 0
      %761 = vmatprep.subr.bf16.mxu0 0
      %762 = vmatpush1.bf16.msra.mxu0 0
      %763 = vmatprep.subr.bf16.mxu0 0
      %764 = vmatpush1.bf16.msra.mxu0 0
      %765 = vmatprep.subr.bf16.mxu0 0
      %766 = vmatpush1.bf16.msra.mxu0 0
      %767 = vmatprep.subr.bf16.mxu0 0
      %768 = vmatpush1.bf16.msra.mxu0 0
      %769 = vmatprep.subr.bf16.mxu0 0
      %770 = vmatpush1.bf16.msra.mxu0 0
      %771 = vmatprep.subr.bf16.mxu0 0
      %772 = vmatpush1.bf16.msra.mxu0 0
      %773 = vmatprep.subr.bf16.mxu0 0
      %774 = vmatpush1.bf16.msra.mxu0 0
      %775 = vmatprep.subr.bf16.mxu0 0
      %776 = vmatpush1.bf16.msra.mxu0 0
      %777 = vmatprep.subr.bf16.mxu0 0
      %778 = vmatpush1.bf16.msra.mxu0 0
      %779 = vmatprep.subr.bf16.mxu0 0
      %780 = vmatpush1.bf16.msra.mxu0 0
      %781 = vmatprep.mubr.bf16.mxu0 0
      %782 = vmatmul.mubr.bf16.gmra.mrb[0].mxu0 %v747
      %v783 = vpop.f32.mrb[0].mxu0
      %v784 = vadd.f32 0.0, %v783
      %v785 = vpop.f32.mrb[0].mxu0
      %v786 = vpop.f32.mrb[0].mxu0
      %v787 = vpop.f32.mrb[0].mxu0
      %788 = vdwg.mxu0
      %v789 = vadd.f32 %v741, %v784
      %v790 = vxor.u32 %v789, 2147483648
      %v791 = vmul.f32 %v790, 1.442695
      %v792 = vpow.pop %v791
      %v793 = vadd.f32 %v792, 1.0
      %v794 = vrcp.pop %v793
      %v795 = vmul.f32 1.0, %v794
      %v796 = vtanh.pop %v789
      %v797 = vmul.f32 %v795, %v739
      %799 = vrot.lane.b32.xlu0 %v796, 64
      %v800 = vpop.permute.xlu0 %799
      %v802 = vmul.f32 %v795, %v800
      %804 = vrot.lane.b32.xlu0 %v802, 32
      %v805 = vpop.permute.xlu0 %804
      %v807 = vadd.f32 %v797, %v805
      %v808 = vtanh.pop %v807
      %810 = vrot.lane.b32.xlu0 %v808, 64
      %v811 = vpop.permute.xlu0 %810
      %v813 = vmul.f32 %v795, %v811
      %vm814 = vcmp.gt.s32.totalorder %v562, 2
      %v815 = vsel %vm814, %v813, %v738
      %v816 = vsel %vm814, %v807, %v739
      %s817 = scalar_lea.vmem [#allocation2], 24
      %v818 = vld [vmem:[%s817] sm:$0xff]
      %v819 = vpack.c.bf16 %v815, %v815
      %821 = vrot.lane.b32.xlu0 %v819, 32
      %v822 = vpop.permute.xlu0 %821
      %v824 = vsel %vm583, %v822, 0
      %826 = vmatprep.subr.bf16.mxu0 0
      %827 = vmatpush1.bf16.msra.mxu0 %v579
      %828 = vmatprep.subr.bf16.mxu0 0
      %829 = vmatpush1.bf16.msra.mxu0 %v580
      %830 = vmatprep.subr.bf16.mxu0 0
      %831 = vmatpush1.bf16.msra.mxu0 0
      %832 = vmatprep.subr.bf16.mxu0 0
      %833 = vmatpush1.bf16.msra.mxu0 0
      %834 = vmatprep.subr.bf16.mxu0 0
      %835 = vmatpush1.bf16.msra.mxu0 0
      %836 = vmatprep.subr.bf16.mxu0 0
      %837 = vmatpush1.bf16.msra.mxu0 0
      %838 = vmatprep.subr.bf16.mxu0 0
      %839 = vmatpush1.bf16.msra.mxu0 0
      %840 = vmatprep.subr.bf16.mxu0 0
      %841 = vmatpush1.bf16.msra.mxu0 0
      %842 = vmatprep.subr.bf16.mxu0 0
      %843 = vmatpush1.bf16.msra.mxu0 0
      %844 = vmatprep.subr.bf16.mxu0 0
      %845 = vmatpush1.bf16.msra.mxu0 0
      %846 = vmatprep.subr.bf16.mxu0 0
      %847 = vmatpush1.bf16.msra.mxu0 0
      %848 = vmatprep.subr.bf16.mxu0 0
      %849 = vmatpush1.bf16.msra.mxu0 0
      %850 = vmatprep.subr.bf16.mxu0 0
      %851 = vmatpush1.bf16.msra.mxu0 0
      %852 = vmatprep.subr.bf16.mxu0 0
      %853 = vmatpush1.bf16.msra.mxu0 0
      %854 = vmatprep.subr.bf16.mxu0 0
      %855 = vmatpush1.bf16.msra.mxu0 0
      %856 = vmatprep.subr.bf16.mxu0 0
      %857 = vmatpush1.bf16.msra.mxu0 0
      %858 = vmatprep.mubr.bf16.mxu0 0
      %859 = vmatmul.mubr.bf16.gmra.mrb[0].mxu0 %v824
      %v860 = vpop.f32.mrb[0].mxu0
      %v861 = vadd.f32 0.0, %v860
      %v862 = vpop.f32.mrb[0].mxu0
      %v863 = vpop.f32.mrb[0].mxu0
      %v864 = vpop.f32.mrb[0].mxu0
      %865 = vdwg.mxu0
      %v866 = vadd.f32 %v818, %v861
      %v867 = vxor.u32 %v866, 2147483648
      %v868 = vmul.f32 %v867, 1.442695
      %v869 = vpow.pop %v868
      %v870 = vadd.f32 %v869, 1.0
      %v871 = vrcp.pop %v870
      %v872 = vmul.f32 1.0, %v871
      %v873 = vtanh.pop %v866
      %v874 = vmul.f32 %v872, %v816
      %876 = vrot.lane.b32.xlu0 %v873, 64
      %v877 = vpop.permute.xlu0 %876
      %v879 = vmul.f32 %v872, %v877
      %881 = vrot.lane.b32.xlu0 %v879, 32
      %v882 = vpop.permute.xlu0 %881
      %v884 = vadd.f32 %v874, %v882
      %v885 = vtanh.pop %v884
      %887 = vrot.lane.b32.xlu0 %v885, 64
      %v888 = vpop.permute.xlu0 %887
      %v890 = vmul.f32 %v872, %v888
      %vm891 = vcmp.gt.s32.totalorder %v562, 3
      %v892 = vsel %vm891, %v890, %v815
      %v893 = vsel %vm891, %v884, %v816
      %s894 = scalar_lea.vmem [#allocation2], 32
      %v895 = vld [vmem:[%s894] sm:$0xff]
      %v896 = vpack.c.bf16 %v892, %v892
      %898 = vrot.lane.b32.xlu0 %v896, 32
      %v899 = vpop.permute.xlu0 %898
      %v901 = vsel %vm583, %v899, 0
      %903 = vmatprep.subr.bf16.mxu0 0
      %904 = vmatpush1.bf16.msra.mxu0 %v579
      %905 = vmatprep.subr.bf16.mxu0 0
      %906 = vmatpush1.bf16.msra.mxu0 %v580
      %907 = vmatprep.subr.bf16.mxu0 0
      %908 = vmatpush1.bf16.msra.mxu0 0
      %909 = vmatprep.subr.bf16.mxu0 0
      %910 = vmatpush1.bf16.msra.mxu0 0
      %911 = vmatprep.subr.bf16.mxu0 0
      %912 = vmatpush1.bf16.msra.mxu0 0
      %913 = vmatprep.subr.bf16.mxu0 0
      %914 = vmatpush1.bf16.msra.mxu0 0
      %915 = vmatprep.subr.bf16.mxu0 0
      %916 = vmatpush1.bf16.msra.mxu0 0
      %917 = vmatprep.subr.bf16.mxu0 0
      %918 = vmatpush1.bf16.msra.mxu0 0
      %919 = vmatprep.subr.bf16.mxu0 0
      %920 = vmatpush1.bf16.msra.mxu0 0
      %921 = vmatprep.subr.bf16.mxu0 0
      %922 = vmatpush1.bf16.msra.mxu0 0
      %923 = vmatprep.subr.bf16.mxu0 0
      %924 = vmatpush1.bf16.msra.mxu0 0
      %925 = vmatprep.subr.bf16.mxu0 0
      %926 = vmatpush1.bf16.msra.mxu0 0
      %927 = vmatprep.subr.bf16.mxu0 0
      %928 = vmatpush1.bf16.msra.mxu0 0
      %929 = vmatprep.subr.bf16.mxu0 0
      %930 = vmatpush1.bf16.msra.mxu0 0
      %931 = vmatprep.subr.bf16.mxu0 0
      %932 = vmatpush1.bf16.msra.mxu0 0
      %933 = vmatprep.subr.bf16.mxu0 0
      %934 = vmatpush1.bf16.msra.mxu0 0
      %935 = vmatprep.mubr.bf16.mxu0 0
      %936 = vmatmul.mubr.bf16.gmra.mrb[0].mxu0 %v901
      %v937 = vpop.f32.mrb[0].mxu0
      %v938 = vadd.f32 0.0, %v937
      %v939 = vpop.f32.mrb[0].mxu0
      %v940 = vpop.f32.mrb[0].mxu0
      %v941 = vpop.f32.mrb[0].mxu0
      %942 = vdwg.mxu0
      %v943 = vadd.f32 %v895, %v938
      %v944 = vxor.u32 %v943, 2147483648
      %v945 = vmul.f32 %v944, 1.442695
      %v946 = vpow.pop %v945
      %v947 = vadd.f32 %v946, 1.0
      %v948 = vrcp.pop %v947
      %v949 = vmul.f32 1.0, %v948
      %v950 = vtanh.pop %v943
      %v951 = vmul.f32 %v949, %v893
      %953 = vrot.lane.b32.xlu0 %v950, 64
      %v954 = vpop.permute.xlu0 %953
      %v956 = vmul.f32 %v949, %v954
      %958 = vrot.lane.b32.xlu0 %v956, 32
      %v959 = vpop.permute.xlu0 %958
      %v961 = vadd.f32 %v951, %v959
      %v962 = vtanh.pop %v961
      %964 = vrot.lane.b32.xlu0 %v962, 64
      %v965 = vpop.permute.xlu0 %964
      %v967 = vmul.f32 %v949, %v965
      %vm968 = vcmp.gt.s32.totalorder %v562, 4
      %v969 = vsel %vm968, %v967, %v892
      %v970 = vsel %vm968, %v961, %v893
      %s971 = scalar_lea.vmem [#allocation2], 40
      %v972 = vld [vmem:[%s971] sm:$0xff]
      %v973 = vpack.c.bf16 %v969, %v969
      %975 = vrot.lane.b32.xlu0 %v973, 32
      %v976 = vpop.permute.xlu0 %975
      %v978 = vsel %vm583, %v976, 0
      %980 = vmatprep.subr.bf16.mxu0 0
      %981 = vmatpush1.bf16.msra.mxu0 %v579
      %982 = vmatprep.subr.bf16.mxu0 0
      %983 = vmatpush1.bf16.msra.mxu0 %v580
      %984 = vmatprep.subr.bf16.mxu0 0
      %985 = vmatpush1.bf16.msra.mxu0 0
      %986 = vmatprep.subr.bf16.mxu0 0
      %987 = vmatpush1.bf16.msra.mxu0 0
      %988 = vmatprep.subr.bf16.mxu0 0
      %989 = vmatpush1.bf16.msra.mxu0 0
      %990 = vmatprep.subr.bf16.mxu0 0
      %991 = vmatpush1.bf16.msra.mxu0 0
      %992 = vmatprep.subr.bf16.mxu0 0
      %993 = vmatpush1.bf16.msra.mxu0 0
      %994 = vmatprep.subr.bf16.mxu0 0
      %995 = vmatpush1.bf16.msra.mxu0 0
      %996 = vmatprep.subr.bf16.mxu0 0
      %997 = vmatpush1.bf16.msra.mxu0 0
      %998 = vmatprep.subr.bf16.mxu0 0
      %999 = vmatpush1.bf16.msra.mxu0 0
      %1000 = vmatprep.subr.bf16.mxu0 0
      %1001 = vmatpush1.bf16.msra.mxu0 0
      %1002 = vmatprep.subr.bf16.mxu0 0
      %1003 = vmatpush1.bf16.msra.mxu0 0
      %1004 = vmatprep.subr.bf16.mxu0 0
      %1005 = vmatpush1.bf16.msra.mxu0 0
      %1006 = vmatprep.subr.bf16.mxu0 0
      %1007 = vmatpush1.bf16.msra.mxu0 0
      %1008 = vmatprep.subr.bf16.mxu0 0
      %1009 = vmatpush1.bf16.msra.mxu0 0
      %1010 = vmatprep.subr.bf16.mxu0 0
      %1011 = vmatpush1.bf16.msra.mxu0 0
      %1012 = vmatprep.mubr.bf16.mxu0 0
      %1013 = vmatmul.mubr.bf16.gmra.mrb[0].mxu0 %v978
      %v1014 = vpop.f32.mrb[0].mxu0
      %v1015 = vadd.f32 0.0, %v1014
      %v1016 = vpop.f32.mrb[0].mxu0
      %v1017 = vpop.f32.mrb[0].mxu0
      %v1018 = vpop.f32.mrb[0].mxu0
      %1019 = vdwg.mxu0
      %v1020 = vadd.f32 %v972, %v1015
      %v1021 = vxor.u32 %v1020, 2147483648
      %v1022 = vmul.f32 %v1021, 1.442695
      %v1023 = vpow.pop %v1022
      %v1024 = vadd.f32 %v1023, 1.0
      %v1025 = vrcp.pop %v1024
      %v1026 = vmul.f32 1.0, %v1025
      %v1027 = vtanh.pop %v1020
      %v1028 = vmul.f32 %v1026, %v970
      %1030 = vrot.lane.b32.xlu0 %v1027, 64
      %v1031 = vpop.permute.xlu0 %1030
      %v1033 = vmul.f32 %v1026, %v1031
      %1035 = vrot.lane.b32.xlu0 %v1033, 32
      %v1036 = vpop.permute.xlu0 %1035
      %v1038 = vadd.f32 %v1028, %v1036
      %v1039 = vtanh.pop %v1038
      %1041 = vrot.lane.b32.xlu0 %v1039, 64
      %v1042 = vpop.permute.xlu0 %1041
      %v1044 = vmul.f32 %v1026, %v1042
      %vm1045 = vcmp.gt.s32.totalorder %v562, 5
      %v1046 = vsel %vm1045, %v1044, %v969
      %v1047 = vsel %vm1045, %v1038, %v970
      %s1048 = scalar_lea.vmem [#allocation2], 48
      %v1049 = vld [vmem:[%s1048] sm:$0xff]
      %v1050 = vpack.c.bf16 %v1046, %v1046
      %1052 = vrot.lane.b32.xlu0 %v1050, 32
      %v1053 = vpop.permute.xlu0 %1052
      %v1055 = vsel %vm583, %v1053, 0
      %1057 = vmatprep.subr.bf16.mxu0 0
      %1058 = vmatpush1.bf16.msra.mxu0 %v579
      %1059 = vmatprep.subr.bf16.mxu0 0
      %1060 = vmatpush1.bf16.msra.mxu0 %v580
      %1061 = vmatprep.subr.bf16.mxu0 0
      %1062 = vmatpush1.bf16.msra.mxu0 0
      %1063 = vmatprep.subr.bf16.mxu0 0
      %1064 = vmatpush1.bf16.msra.mxu0 0
      %1065 = vmatprep.subr.bf16.mxu0 0
      %1066 = vmatpush1.bf16.msra.mxu0 0
      %1067 = vmatprep.subr.bf16.mxu0 0
      %1068 = vmatpush1.bf16.msra.mxu0 0
      %1069 = vmatprep.subr.bf16.mxu0 0
      %1070 = vmatpush1.bf16.msra.mxu0 0
      %1071 = vmatprep.subr.bf16.mxu0 0
      %1072 = vmatpush1.bf16.msra.mxu0 0
      %1073 = vmatprep.subr.bf16.mxu0 0
      %1074 = vmatpush1.bf16.msra.mxu0 0
      %1075 = vmatprep.subr.bf16.mxu0 0
      %1076 = vmatpush1.bf16.msra.mxu0 0
      %1077 = vmatprep.subr.bf16.mxu0 0
      %1078 = vmatpush1.bf16.msra.mxu0 0
      %1079 = vmatprep.subr.bf16.mxu0 0
      %1080 = vmatpush1.bf16.msra.mxu0 0
      %1081 = vmatprep.subr.bf16.mxu0 0
      %1082 = vmatpush1.bf16.msra.mxu0 0
      %1083 = vmatprep.subr.bf16.mxu0 0
      %1084 = vmatpush1.bf16.msra.mxu0 0
      %1085 = vmatprep.subr.bf16.mxu0 0
      %1086 = vmatpush1.bf16.msra.mxu0 0
      %1087 = vmatprep.subr.bf16.mxu0 0
      %1088 = vmatpush1.bf16.msra.mxu0 0
      %1089 = vmatprep.mubr.bf16.mxu0 0
      %1090 = vmatmul.mubr.bf16.gmra.mrb[0].mxu0 %v1055
      %v1091 = vpop.f32.mrb[0].mxu0
      %v1092 = vadd.f32 0.0, %v1091
      %v1093 = vpop.f32.mrb[0].mxu0
      %v1094 = vpop.f32.mrb[0].mxu0
      %v1095 = vpop.f32.mrb[0].mxu0
      %1096 = vdwg.mxu0
      %v1097 = vadd.f32 %v1049, %v1092
      %v1098 = vxor.u32 %v1097, 2147483648
      %v1099 = vmul.f32 %v1098, 1.442695
      %v1100 = vpow.pop %v1099
      %v1101 = vadd.f32 %v1100, 1.0
      %v1102 = vrcp.pop %v1101
      %v1103 = vmul.f32 1.0, %v1102
      %v1104 = vtanh.pop %v1097
      %v1105 = vmul.f32 %v1103, %v1047
      %1107 = vrot.lane.b32.xlu0 %v1104, 64
      %v1108 = vpop.permute.xlu0 %1107
      %v1110 = vmul.f32 %v1103, %v1108
      %1112 = vrot.lane.b32.xlu0 %v1110, 32
      %v1113 = vpop.permute.xlu0 %1112
      %v1115 = vadd.f32 %v1105, %v1113
      %v1116 = vtanh.pop %v1115
      %1118 = vrot.lane.b32.xlu0 %v1116, 64
      %v1119 = vpop.permute.xlu0 %1118
      %v1121 = vmul.f32 %v1103, %v1119
      %vm1122 = vcmp.gt.s32.totalorder %v562, 6
      %v1123 = vsel %vm1122, %v1121, %v1046
      %v1124 = vsel %vm1122, %v1115, %v1047
      %s1125 = scalar_lea.vmem [#allocation2], 56
      %v1126 = vld [vmem:[%s1125] sm:$0xff]
      %v1127 = vpack.c.bf16 %v1123, %v1123
      %1129 = vrot.lane.b32.xlu0 %v1127, 32
      %v1130 = vpop.permute.xlu0 %1129
      %v1132 = vsel %vm583, %v1130, 0
      %1134 = vmatprep.subr.bf16.mxu0 0
      %1135 = vmatpush1.bf16.msra.mxu0 %v579
      %1136 = vmatprep.subr.bf16.mxu0 0
      %1137 = vmatpush1.bf16.msra.mxu0 %v580
      %1138 = vmatprep.subr.bf16.mxu0 0
      %1139 = vmatpush1.bf16.msra.mxu0 0
      %1140 = vmatprep.subr.bf16.mxu0 0
      %1141 = vmatpush1.bf16.msra.mxu0 0
      %1142 = vmatprep.subr.bf16.mxu0 0
      %1143 = vmatpush1.bf16.msra.mxu0 0
      %1144 = vmatprep.subr.bf16.mxu0 0
      %1145 = vmatpush1.bf16.msra.mxu0 0
      %1146 = vmatprep.subr.bf16.mxu0 0
      %1147 = vmatpush1.bf16.msra.mxu0 0
      %1148 = vmatprep.subr.bf16.mxu0 0
      %1149 = vmatpush1.bf16.msra.mxu0 0
      %1150 = vmatprep.subr.bf16.mxu0 0
      %1151 = vmatpush1.bf16.msra.mxu0 0
      %1152 = vmatprep.subr.bf16.mxu0 0
      %1153 = vmatpush1.bf16.msra.mxu0 0
      %1154 = vmatprep.subr.bf16.mxu0 0
      %1155 = vmatpush1.bf16.msra.mxu0 0
      %1156 = vmatprep.subr.bf16.mxu0 0
      %1157 = vmatpush1.bf16.msra.mxu0 0
      %1158 = vmatprep.subr.bf16.mxu0 0
      %1159 = vmatpush1.bf16.msra.mxu0 0
      %1160 = vmatprep.subr.bf16.mxu0 0
      %1161 = vmatpush1.bf16.msra.mxu0 0
      %1162 = vmatprep.subr.bf16.mxu0 0
      %1163 = vmatpush1.bf16.msra.mxu0 0
      %1164 = vmatprep.subr.bf16.mxu0 0
      %1165 = vmatpush1.bf16.msra.mxu0 0
      %1166 = vmatprep.mubr.bf16.mxu0 0
      %1167 = vmatmul.mubr.bf16.gmra.mrb[0].mxu0 %v1132
      %v1168 = vpop.f32.mrb[0].mxu0
      %v1169 = vadd.f32 0.0, %v1168
      %v1170 = vpop.f32.mrb[0].mxu0
      %v1171 = vpop.f32.mrb[0].mxu0
      %v1172 = vpop.f32.mrb[0].mxu0
      %1173 = vdwg.mxu0
      %v1174 = vadd.f32 %v1126, %v1169
      %v1175 = vxor.u32 %v1174, 2147483648
      %v1176 = vmul.f32 %v1175, 1.442695
      %v1177 = vpow.pop %v1176
      %v1178 = vadd.f32 %v1177, 1.0
      %v1179 = vrcp.pop %v1178
      %v1180 = vmul.f32 1.0, %v1179
      %v1181 = vtanh.pop %v1174
      %v1182 = vmul.f32 %v1180, %v1124
      %1184 = vrot.lane.b32.xlu0 %v1181, 64
      %v1185 = vpop.permute.xlu0 %1184
      %v1187 = vmul.f32 %v1180, %v1185
      %1189 = vrot.lane.b32.xlu0 %v1187, 32
      %v1190 = vpop.permute.xlu0 %1189
      %v1192 = vadd.f32 %v1182, %v1190
      %v1193 = vtanh.pop %v1192
      %1195 = vrot.lane.b32.xlu0 %v1193, 64
      %v1196 = vpop.permute.xlu0 %1195
      %v1198 = vmul.f32 %v1180, %v1196
      %vm1199 = vcmp.gt.s32.totalorder %v562, 7
      %v1200 = vsel %vm1199, %v1198, %v1123
      %v1201 = vld [vmem:[%s424] sm:$0xff]
      %v1202 = vld [vmem:[%s424 + $0x8] sm:$0xff]
      %v1203 = vld [vmem:[%s424 + $0x10] sm:$0xff]
      %v1204 = vld [vmem:[%s424 + $0x18] sm:$0xff]
      %1206 = vrot.lane.b32.xlu0 %v1200, 32
      %v1207 = vpop.permute.xlu0 %1206
      %v1208 = vsel %vm583, %v1207, 0
      %1210 = vmatprep.subr.mxu0 0.0
      %1211 = vmatpush1.msra.mxu0 %v1201
      %1212 = vmatprep.subr.mxu0 0.0
      %1213 = vmatpush1.msra.mxu0 %v1202
      %1214 = vmatprep.subr.mxu0 0.0
      %1215 = vmatpush1.msra.mxu0 %v1203
      %1216 = vmatprep.subr.mxu0 0.0
      %1217 = vmatpush1.msra.mxu0 %v1204
      %1218 = vmatprep.subr.mxu0 0.0
      %1219 = vmatpush1.msra.mxu0 0.0
      %1220 = vmatprep.subr.mxu0 0.0
      %1221 = vmatpush1.msra.mxu0 0.0
      %1222 = vmatprep.subr.mxu0 0.0
      %1223 = vmatpush1.msra.mxu0 0.0
      %1224 = vmatprep.subr.mxu0 0.0
      %1225 = vmatpush1.msra.mxu0 0.0
      %1226 = vmatprep.subr.mxu0 0.0
      %1227 = vmatpush1.msra.mxu0 0.0
      %1228 = vmatprep.subr.mxu0 0.0
      %1229 = vmatpush1.msra.mxu0 0.0
      %1230 = vmatprep.subr.mxu0 0.0
      %1231 = vmatpush1.msra.mxu0 0.0
      %1232 = vmatprep.subr.mxu0 0.0
      %1233 = vmatpush1.msra.mxu0 0.0
      %1234 = vmatprep.subr.mxu0 0.0
      %1235 = vmatpush1.msra.mxu0 0.0
      %1236 = vmatprep.subr.mxu0 0.0
      %1237 = vmatpush1.msra.mxu0 0.0
      %1238 = vmatprep.subr.mxu0 0.0
      %1239 = vmatpush1.msra.mxu0 0.0
      %1240 = vmatprep.subr.mxu0 0.0
      %1241 = vmatpush1.msra.mxu0 0.0
      %1242 = vmatprep.subr.mxu0 0.0
      %1243 = vmatpush1.msra.mxu0 0.0
      %1244 = vmatprep.subr.mxu0 0.0
      %1245 = vmatpush1.msra.mxu0 0.0
      %1246 = vmatprep.subr.mxu0 0.0
      %1247 = vmatpush1.msra.mxu0 0.0
      %1248 = vmatprep.subr.mxu0 0.0
      %1249 = vmatpush1.msra.mxu0 0.0
      %1250 = vmatprep.subr.mxu0 0.0
      %1251 = vmatpush1.msra.mxu0 0.0
      %1252 = vmatprep.subr.mxu0 0.0
      %1253 = vmatpush1.msra.mxu0 0.0
      %1254 = vmatprep.subr.mxu0 0.0
      %1255 = vmatpush1.msra.mxu0 0.0
      %1256 = vmatprep.subr.mxu0 0.0
      %1257 = vmatpush1.msra.mxu0 0.0
      %1258 = vmatprep.subr.mxu0 0.0
      %1259 = vmatpush1.msra.mxu0 0.0
      %1260 = vmatprep.subr.mxu0 0.0
      %1261 = vmatpush1.msra.mxu0 0.0
      %1262 = vmatprep.subr.mxu0 0.0
      %1263 = vmatpush1.msra.mxu0 0.0
      %1264 = vmatprep.subr.mxu0 0.0
      %1265 = vmatpush1.msra.mxu0 0.0
      %1266 = vmatprep.subr.mxu0 0.0
      %1267 = vmatpush1.msra.mxu0 0.0
      %1268 = vmatprep.subr.mxu0 0.0
      %1269 = vmatpush1.msra.mxu0 0.0
      %1270 = vmatprep.subr.mxu0 0.0
      %1271 = vmatpush1.msra.mxu0 0.0
      %1272 = vmatprep.subr.mxu0 0.0
      %1273 = vmatpush1.msra.mxu0 0.0
      %1274 = vmatprep.mubr.f32.mxu0 0.0
      %1275 = vmatmul.mubr.f32.gmra.mrb[0].mxu0 %v1208
      %v1276 = vpop.f32.mrb[0].mxu0
      %v1277 = vadd.f32 0.0, %v1276
      %v1278 = vpop.f32.mrb[0].mxu0
      %1279 = vdwg.mxu0
      %vm1280 = vcmask 31744
      %1281 = vst.msk [vmem:[%s428] sm:$0xff] %vm1280, %v1277
      %p1282 = scmp.lt.s32.totalorder %s19, 1
      %s1283 = scalar_select %p1282, %s19, 1
      %s1284 = smul.addr %s1283, 8
      %s1285 = scalar_lea.vmem %s8, %s1284
      // Predicated region
      $region53: #{forward.3} parent=51 // pred_check
        %p1286 = pneg %p245
      $region54: #{forward.3} parent=51 // pred_check_branch
        %1288 = sbr.rel (%p1286) target = $region56
      $region55: #{forward.3} parent=51 // pred_region
        _
      $region56: #{forward.3} parent=51 // pred_fallthru
        _
    $region52: #{forward.3} parent=5 // pred_fallthru
      _
    %p1289 = scmp.le.s32.totalorder 2, %s14
    // Predicated region
    $region57: #{forward.3} parent=5 // pred_check
      %p1290 = pneg %p1289
    $region58: #{forward.3} parent=5 // pred_check_branch
      %1292 = sbr.rel (%p1290) target = $region60
    $region59: #{forward.3} parent=5 // pred_region
      %s1293 = ssub.s32 %s14, 2
      // Predicated region
      $region61: #{forward.3} parent=59 // pred_check
        %p1294 = pneg %p251
      $region62: #{forward.3} parent=59 // pred_check_branch
        %1296 = sbr.rel (%p1294) target = $region64
      $region63: #{forward.3} parent=59 // pred_region
        %p1297 = scmp.lt.s32.totalorder %s20, 1
        %s1298 = scalar_select %p1297, %s20, 1
        %s1299 = smul.addr %s1298, 8
        %s1300 = scalar_lea.vmem %s8, %s1299
      $region64: #{forward.3} parent=59 // pred_fallthru
        _
    $region60: #{forward.3} parent=5 // pred_fallthru
      _
  $region6: #{forward.3} parent=0 // loop_footer
    %s18 = sadd.s32 1, %s14
  $region7: #{forward.3} parent=0 // loop_footer_branch
    %13 = sbr.rel target = $region3
  $region8: #{forward.3} parent=0 // loop_exit
    _

</llo_original>
